<compile_context>
chip_gen: v5e
topology: v5e:2x2
jax: 0.10.0
libtpu: 0.0.40
codegen_flags: <defaults>
</compile_context>

<pallas_src>
import functools
import math

import jax
import jax.numpy as jnp
from jax.experimental import pallas as pl
from jax.experimental.pallas import tpu as pltpu


def _rmsnorm(x, scale, eps=1e-5):
    # x: (T, D) f32, scale: (1, D)
    mean = jnp.mean(x * x, axis=-1, keepdims=True)
    return scale.astype(jnp.float32) * (x * jax.lax.rsqrt(mean + eps))


def llama2_kernel(x_ref, n1_ref, wqkv_ref, bqkv_ref, wo_ref, bo_ref,
                  n2_ref, w1_ref, w2_ref, w3_ref, fnorm_ref, wout_ref,
                  logits_ref, act_ref, *, num_heads):
    layer = pl.program_id(1)

    # Load this batch element's embeddings into the resident VMEM activation
    # at the first layer step; it stays in VMEM across the whole layer axis.
    @pl.when(layer == 0)
    def _():
        act_ref[...] = x_ref[0].astype(jnp.float32)

    x = act_ref[...]                          # (T, D) f32
    shortcut = x
    T, D = x.shape
    hd = D // num_heads

    # ---- RMSNorm 1 ----
    xn = _rmsnorm(x, n1_ref[0])

    # ---- fused QKV projection (one MXU push + one bias add instead of 3) ----
    qkv = jnp.dot(xn, wqkv_ref[0].astype(jnp.float32),
                  preferred_element_type=jnp.float32) + bqkv_ref[0].astype(jnp.float32)
    q = qkv[:, :D] * (1.0 / math.sqrt(hd))    # fold 1/sqrt(head_dim) into q
    k = qkv[:, D:2 * D]
    v = qkv[:, 2 * D:]

    # ---- batched multi-head attention (no per-head Python loop) ----
    q3 = q.reshape(T, num_heads, hd)
    k3 = k.reshape(T, num_heads, hd)
    v3 = v.reshape(T, num_heads, hd)
    s = jnp.einsum('thd,shd->hts', q3, k3, preferred_element_type=jnp.float32)
    s = s - jnp.max(s, axis=-1, keepdims=True)
    p = jnp.exp(s)
    p = p * pl.reciprocal(jnp.sum(p, axis=-1, keepdims=True), approx=True)
    ctx = jnp.einsum('hts,shd->thd', p, v3, preferred_element_type=jnp.float32)
    attn = ctx.reshape(T, D)
    attn = jnp.dot(attn, wo_ref[0].astype(jnp.float32),
                   preferred_element_type=jnp.float32) + bo_ref[0].astype(jnp.float32)

    x = shortcut + attn

    # ---- RMSNorm 2 + FeedForward (faithful: fc2 is applied to x1) ----
    xn2 = _rmsnorm(x, n2_ref[0])
    x1 = jnp.dot(xn2, w1_ref[0].astype(jnp.float32), preferred_element_type=jnp.float32)
    x2 = jnp.dot(x1, w2_ref[0].astype(jnp.float32), preferred_element_type=jnp.float32)
    hmid = (x1 * jax.nn.sigmoid(x1)) * x2                      # SiLU(x1) * x2
    ffo = jnp.dot(hmid, w3_ref[0].astype(jnp.float32), preferred_element_type=jnp.float32)

    # final residual uses the ORIGINAL block input (as in the PyTorch code)
    out = ffo + shortcut
    act_ref[...] = out

    # ---- final RMSNorm + LM head fused into the last layer step ----
    @pl.when(layer == pl.num_programs(1) - 1)
    def _():
        xf = _rmsnorm(out, fnorm_ref[...])
        logits_ref[0] = jnp.dot(xf, wout_ref[...].astype(jnp.float32),
                                preferred_element_type=jnp.float32).astype(logits_ref.dtype)


def llama2_forward(params, in_idx, cfg):
    # token-embedding gather stays in plain JAX (glue feeding the fused kernel)
    x = params['tok_emb'][in_idx]                 # (B, T, D)
    B, T, D = x.shape
    H = cfg['hidden_dim']
    L = cfg['n_layers']
    V = params['out_head_t'].shape[1]
    s = params['stacked']

    wmap = lambda b, l: (l, 0, 0)     # per-layer stacked weights
    cmap = lambda b, l: (0, 0)        # shared tensors (final norm / LM head)

    in_specs = [
        pl.BlockSpec((1, T, D), lambda b, l: (b, 0, 0)),   # x (per batch element)
        pl.BlockSpec((1, 1, D), wmap),                     # n1
        pl.BlockSpec((1, D, 3 * D), wmap),                 # wqkv
        pl.BlockSpec((1, 1, 3 * D), wmap),                 # bqkv
        pl.BlockSpec((1, D, D), wmap),                     # wo
        pl.BlockSpec((1, 1, D), wmap),                     # bo
        pl.BlockSpec((1, 1, D), wmap),                     # n2
        pl.BlockSpec((1, D, H), wmap),                     # w1 (fc1)
        pl.BlockSpec((1, D, H), wmap),                     # w2 (fc2, fed x1)
        pl.BlockSpec((1, H, D), wmap),                     # w3 (fc3)
        pl.BlockSpec((1, D), cmap),                        # final norm scale
        pl.BlockSpec((D, V), cmap),                        # LM head (D, V)
    ]
    out_spec = pl.BlockSpec((1, T, V), lambda b, l: (b, 0, 0))

    return pl.pallas_call(
        functools.partial(llama2_kernel, num_heads=cfg['num_heads']),
        out_shape=jax.ShapeDtypeStruct((B, T, V), x.dtype),
        grid=(B, L),
        in_specs=in_specs,
        out_specs=out_spec,
        scratch_shapes=[pltpu.VMEM((T, D), jnp.float32)],   # resident activation
        compiler_params=pltpu.CompilerParams(
            dimension_semantics=("parallel", "arbitrary")),
    )(x, s['n1'], s['wqkv'], s['bqkv'], s['wo'], s['bo'], s['n2'],
      s['w1'], s['w2'], s['w3'], params['final_norm'], params['out_head_t'])


def init_params(key, cfg):
    D = cfg['emb_dim']
    H = cfg['hidden_dim']
    V = cfg['vocab_size']
    L = cfg['n_layers']
    dt = cfg['dtype']
    # reference FeedForward applies fc2 (emb->hidden) to x1 (hidden-sized):
    assert H == D, "hidden_dim must equal emb_dim to match the reference FeedForward"
    assert D % cfg['num_heads'] == 0

    def nrm(k, shape, scl=0.02):
        return (jax.random.normal(k, shape, dtype=jnp.float32) * scl).astype(dt)

    k = jax.random.split(key, 9)
    params = {
        'tok_emb': nrm(k[0], (V, D), 1.0),
        'final_norm': jnp.ones((1, D), dtype=dt),
        'out_head_t': nrm(k[1], (D, V)),               # pre-transposed to (in, out)
        'stacked': {                                    # per-layer weights on (L, ...)
            'n1': jnp.ones((L, 1, D), dtype=dt),
            'n2': jnp.ones((L, 1, D), dtype=dt),
            'wqkv': nrm(k[2], (L, D, 3 * D)),           # [wq | wk | wv], (in, out)
            'bqkv': nrm(k[3], (L, 1, 3 * D)),           # [bq | bk | bv]
            'wo': nrm(k[4], (L, D, D)),
            'bo': nrm(k[5], (L, 1, D)),
            'w1': nrm(k[6], (L, D, H)),                 # fc1: emb -> hidden
            'w2': nrm(k[7], (L, D, H)),                 # fc2: emb -> hidden (fed x1)
            'w3': nrm(k[8], (L, H, D)),                 # fc3: hidden -> emb
        },
    }
    return params


if __name__ == "__main__":
    cfg = {
        'vocab_size': 128,
        'emb_dim': 32,
        'hidden_dim': 32,        # must equal emb_dim (reference fc2(x1) quirk)
        'context_length': 8,
        'num_heads': 4,
        'n_layers': 2,
        'dtype': jnp.float32,    # use jnp.bfloat16 on v6e/v7x; kernel accumulates in f32
    }
    B, T = 2, cfg['context_length']

    key = jax.random.PRNGKey(0)
    pkey, ikey = jax.random.split(key)
    params = init_params(pkey, cfg)
    in_idx = jax.random.randint(ikey, (B, T), 0, cfg['vocab_size'], dtype=jnp.int32)

    fwd = jax.jit(functools.partial(llama2_forward, cfg=cfg))
    logits = fwd(params, in_idx)
    jax.block_until_ready(logits)
    assert logits.shape == (B, T, cfg['vocab_size'])
    assert bool(jnp.all(jnp.isfinite(logits)))
    print("KERNEL_OK")
</pallas_src>

<mosaic_0001>
module attributes {stable_mosaic.version = 11 : i64} {
  func.func @llama2_kernel(%arg0: i32, %arg1: i32, %arg2: memref<1x8x32xf32, #tpu.memory_space<vmem>>, %arg3: memref<1x1x32xf32, #tpu.memory_space<vmem>>, %arg4: memref<1x32x96xf32, #tpu.memory_space<vmem>>, %arg5: memref<1x1x96xf32, #tpu.memory_space<vmem>>, %arg6: memref<1x32x32xf32, #tpu.memory_space<vmem>>, %arg7: memref<1x1x32xf32, #tpu.memory_space<vmem>>, %arg8: memref<1x1x32xf32, #tpu.memory_space<vmem>>, %arg9: memref<1x32x32xf32, #tpu.memory_space<vmem>>, %arg10: memref<1x32x32xf32, #tpu.memory_space<vmem>>, %arg11: memref<1x32x32xf32, #tpu.memory_space<vmem>>, %arg12: memref<1x32xf32, #tpu.memory_space<vmem>>, %arg13: memref<32x128xf32, #tpu.memory_space<vmem>>, %arg14: memref<1x8x128xf32, #tpu.memory_space<vmem>>, %arg15: memref<8x32xf32, #tpu.memory_space<vmem>>) attributes {dimension_semantics = [#tpu.dimension_semantics<parallel>, #tpu.dimension_semantics<arbitrary>], iteration_bounds = array<i64: 2, 2>, scalar_prefetch = 0 : i64, scratch_operands = 1 : i64, tpu.core_type = #tpu.core_type<tc>, window_params = [{transform_indices = @transform_0, window_bounds = array<i64: 1, 8, 32>}, {transform_indices = @transform_1, window_bounds = array<i64: 1, 1, 32>}, {transform_indices = @transform_2, window_bounds = array<i64: 1, 32, 96>}, {transform_indices = @transform_3, window_bounds = array<i64: 1, 1, 96>}, {transform_indices = @transform_4, window_bounds = array<i64: 1, 32, 32>}, {transform_indices = @transform_5, window_bounds = array<i64: 1, 1, 32>}, {transform_indices = @transform_6, window_bounds = array<i64: 1, 1, 32>}, {transform_indices = @transform_7, window_bounds = array<i64: 1, 32, 32>}, {transform_indices = @transform_8, window_bounds = array<i64: 1, 32, 32>}, {transform_indices = @transform_9, window_bounds = array<i64: 1, 32, 32>}, {pipeline_mode = #tpu.pipeline_mode<synchronous>, transform_indices = @transform_10, window_bounds = array<i64: 1, 32>}, {pipeline_mode = #tpu.pipeline_mode<synchronous>, transform_indices = @transform_11, window_bounds = array<i64: 32, 128>}, {transform_indices = @transform_12, window_bounds = array<i64: 1, 8, 128>}]} {
    %c0_i32 = arith.constant 0 : i32
    %0 = arith.cmpi eq, %arg1, %c0_i32 : i32
    %1 = arith.extui %0 : i1 to i32
    %c0_i32_0 = arith.constant 0 : i32
    %2 = arith.cmpi ne, %1, %c0_i32_0 : i32
    scf.if %2 {
      %c0_48 = arith.constant 0 : index
      %c0_49 = arith.constant 0 : index
      %c0_50 = arith.constant 0 : index
      %90 = vector.load %arg2[%c0_48, %c0_49, %c0_50] : memref<1x8x32xf32, #tpu.memory_space<vmem>>, vector<1x8x32xf32>
      %91 = vector.shape_cast %90 : vector<1x8x32xf32> to vector<8x32xf32>
      %c0_51 = arith.constant 0 : index
      %c0_52 = arith.constant 0 : index
      %92 = vector.load %arg15[%c0_51, %c0_52] : memref<8x32xf32, #tpu.memory_space<vmem>>, vector<8x32xf32>
      tpu.vector_store %arg15[%c0_51, %c0_52], %91 {strides = array<i32>} : memref<8x32xf32, #tpu.memory_space<vmem>>, vector<8x32xf32>,
    } else {
    }
    %c0 = arith.constant 0 : index
    %c0_1 = arith.constant 0 : index
    %3 = vector.load %arg15[%c0, %c0_1] : memref<8x32xf32, #tpu.memory_space<vmem>>, vector<8x32xf32>
    %c0_2 = arith.constant 0 : index
    %c0_3 = arith.constant 0 : index
    %c0_4 = arith.constant 0 : index
    %4 = vector.load %arg3[%c0_2, %c0_3, %c0_4] : memref<1x1x32xf32, #tpu.memory_space<vmem>>, vector<1x1x32xf32>
    %5 = vector.shape_cast %4 : vector<1x1x32xf32> to vector<1x32xf32>
    %6 = arith.mulf %3, %3 : vector<8x32xf32>
    %cst = arith.constant dense<0.000000e+00> : vector<8xf32>
    %7 = vector.multi_reduction <add>, %6, %cst [1] : vector<8x32xf32> to vector<8xf32>
    %8 = vector.shape_cast %7 : vector<8xf32> to vector<8x1xf32>
    %cst_5 = arith.constant 3.200000e+01 : f32
    %9 = vector.broadcast %cst_5 : f32 to vector<8x1xf32>
    %10 = arith.divf %8, %9 : vector<8x1xf32>
    %cst_6 = arith.constant 9.99999974E-6 : f32
    %11 = vector.broadcast %cst_6 : f32 to vector<8x1xf32>
    %12 = arith.addf %10, %11 : vector<8x1xf32>
    %13 = math.rsqrt %12 : vector<8x1xf32>
    %14 = vector.broadcast %13 : vector<8x1xf32> to vector<8x32xf32>
    %15 = arith.mulf %3, %14 : vector<8x32xf32>
    %16 = vector.broadcast %5 : vector<1x32xf32> to vector<8x32xf32>
    %17 = arith.mulf %16, %15 : vector<8x32xf32>
    %c0_7 = arith.constant 0 : index
    %c0_8 = arith.constant 0 : index
    %c0_9 = arith.constant 0 : index
    %18 = vector.load %arg4[%c0_7, %c0_8, %c0_9] : memref<1x32x96xf32, #tpu.memory_space<vmem>>, vector<1x32x96xf32>
    %19 = vector.shape_cast %18 : vector<1x32x96xf32> to vector<32x96xf32>
    %cst_10 = arith.constant dense<0.000000e+00> : vector<8x96xf32>
    %20 = tpu.matmul %17, %19, %cst_10 {dimension_numbers = #tpu.dot_dimension_numbers<[1], [0], [0], [1], [0, 0, 1, 1], [], []>} : vector<8x32xf32>, vector<32x96xf32>, vector<8x96xf32> -> vector<8x96xf32>
    %c0_11 = arith.constant 0 : index
    %c0_12 = arith.constant 0 : index
    %c0_13 = arith.constant 0 : index
    %21 = vector.load %arg5[%c0_11, %c0_12, %c0_13] : memref<1x1x96xf32, #tpu.memory_space<vmem>>, vector<1x1x96xf32>
    %22 = vector.shape_cast %21 : vector<1x1x96xf32> to vector<1x96xf32>
    %23 = vector.broadcast %22 : vector<1x96xf32> to vector<8x96xf32>
    %24 = arith.addf %20, %23 : vector<8x96xf32>
    %25 = vector.extract_strided_slice %24 {offsets = [0, 0], sizes = [8, 32], strides = [1, 1]} : vector<8x96xf32> to vector<8x32xf32>
    %cst_14 = arith.constant 0.353553385 : f32
    %26 = vector.broadcast %cst_14 : f32 to vector<8x32xf32>
    %27 = arith.mulf %25, %26 : vector<8x32xf32>
    %28 = vector.extract_strided_slice %24 {offsets = [0, 32], sizes = [8, 32], strides = [1, 1]} : vector<8x96xf32> to vector<8x32xf32>
    %29 = vector.extract_strided_slice %24 {offsets = [0, 64], sizes = [8, 32], strides = [1, 1]} : vector<8x96xf32> to vector<8x32xf32>
    %30 = vector.shape_cast %27 : vector<8x32xf32> to vector<8x4x8xf32>
    %31 = vector.shape_cast %28 : vector<8x32xf32> to vector<8x4x8xf32>
    %32 = vector.shape_cast %29 : vector<8x32xf32> to vector<8x4x8xf32>
    "tpu.trace_start"() <{level = 10 : i32, message = "thd,shd->hts"}> : () -> ()
    %cst_15 = arith.constant dense<0.000000e+00> : vector<4x8x8xf32>
    %33 = tpu.matmul %30, %31, %cst_15 {dimension_numbers = #tpu.dot_dimension_numbers<[2], [2], [0], [0], [0, 1, 0, 0, 1, 0], [1], [1]>} : vector<8x4x8xf32>, vector<8x4x8xf32>, vector<4x8x8xf32> -> vector<4x8x8xf32>
    "tpu.trace_stop"() : () -> ()
    %cst_16 = arith.constant dense<0xFF800000> : vector<4x8xf32>
    %34 = vector.multi_reduction <maximumf>, %33, %cst_16 [2] : vector<4x8x8xf32> to vector<4x8xf32>
    %35 = vector.shape_cast %34 : vector<4x8xf32> to vector<4x8x1xf32>
    %36 = vector.broadcast %35 : vector<4x8x1xf32> to vector<4x8x8xf32>
    %37 = arith.subf %33, %36 : vector<4x8x8xf32>
    %38 = math.exp %37 : vector<4x8x8xf32>
    %cst_17 = arith.constant dense<0.000000e+00> : vector<4x8xf32>
    %39 = vector.multi_reduction <add>, %38, %cst_17 [2] : vector<4x8x8xf32> to vector<4x8xf32>
    %40 = vector.shape_cast %39 : vector<4x8xf32> to vector<4x8x1xf32>
    %41 = tpu.reciprocal %40 {approx = true} : vector<4x8x1xf32> -> vector<4x8x1xf32>
    %42 = vector.broadcast %41 : vector<4x8x1xf32> to vector<4x8x8xf32>
    %43 = arith.mulf %38, %42 : vector<4x8x8xf32>
    "tpu.trace_start"() <{level = 10 : i32, message = "hts,shd->thd"}> : () -> ()
    %cst_18 = arith.constant dense<0.000000e+00> : vector<4x8x8xf32>
    %44 = tpu.matmul %32, %43, %cst_18 {dimension_numbers = #tpu.dot_dimension_numbers<[0], [2], [2], [1], [0, 1, 0, 2, 1, 1], [1], [0]>} : vector<8x4x8xf32>, vector<4x8x8xf32>, vector<4x8x8xf32> -> vector<4x8x8xf32>
    %45 = tpu.transpose %44, [2, 0, 1] : vector<4x8x8xf32> -> vector<8x4x8xf32>
    "tpu.trace_stop"() : () -> ()
    %46 = vector.shape_cast %45 : vector<8x4x8xf32> to vector<8x32xf32>
    %c0_19 = arith.constant 0 : index
    %c0_20 = arith.constant 0 : index
    %c0_21 = arith.constant 0 : index
    %47 = vector.load %arg6[%c0_19, %c0_20, %c0_21] : memref<1x32x32xf32, #tpu.memory_space<vmem>>, vector<1x32x32xf32>
    %48 = vector.shape_cast %47 : vector<1x32x32xf32> to vector<32x32xf32>
    %cst_22 = arith.constant dense<0.000000e+00> : vector<8x32xf32>
    %49 = tpu.matmul %46, %48, %cst_22 {dimension_numbers = #tpu.dot_dimension_numbers<[1], [0], [0], [1], [0, 0, 1, 1], [], []>} : vector<8x32xf32>, vector<32x32xf32>, vector<8x32xf32> -> vector<8x32xf32>
    %c0_23 = arith.constant 0 : index
    %c0_24 = arith.constant 0 : index
    %c0_25 = arith.constant 0 : index
    %50 = vector.load %arg7[%c0_23, %c0_24, %c0_25] : memref<1x1x32xf32, #tpu.memory_space<vmem>>, vector<1x1x32xf32>
    %51 = vector.shape_cast %50 : vector<1x1x32xf32> to vector<1x32xf32>
    %52 = vector.broadcast %51 : vector<1x32xf32> to vector<8x32xf32>
    %53 = arith.addf %49, %52 : vector<8x32xf32>
    %54 = arith.addf %3, %53 : vector<8x32xf32>
    %c0_26 = arith.constant 0 : index
    %c0_27 = arith.constant 0 : index
    %c0_28 = arith.constant 0 : index
    %55 = vector.load %arg8[%c0_26, %c0_27, %c0_28] : memref<1x1x32xf32, #tpu.memory_space<vmem>>, vector<1x1x32xf32>
    %56 = vector.shape_cast %55 : vector<1x1x32xf32> to vector<1x32xf32>
    %57 = arith.mulf %54, %54 : vector<8x32xf32>
    %cst_29 = arith.constant dense<0.000000e+00> : vector<8xf32>
    %58 = vector.multi_reduction <add>, %57, %cst_29 [1] : vector<8x32xf32> to vector<8xf32>
    %59 = vector.shape_cast %58 : vector<8xf32> to vector<8x1xf32>
    %cst_30 = arith.constant 3.200000e+01 : f32
    %60 = vector.broadcast %cst_30 : f32 to vector<8x1xf32>
    %61 = arith.divf %59, %60 : vector<8x1xf32>
    %cst_31 = arith.constant 9.99999974E-6 : f32
    %62 = vector.broadcast %cst_31 : f32 to vector<8x1xf32>
    %63 = arith.addf %61, %62 : vector<8x1xf32>
    %64 = math.rsqrt %63 : vector<8x1xf32>
    %65 = vector.broadcast %64 : vector<8x1xf32> to vector<8x32xf32>
    %66 = arith.mulf %54, %65 : vector<8x32xf32>
    %67 = vector.broadcast %56 : vector<1x32xf32> to vector<8x32xf32>
    %68 = arith.mulf %67, %66 : vector<8x32xf32>
    %c0_32 = arith.constant 0 : index
    %c0_33 = arith.constant 0 : index
    %c0_34 = arith.constant 0 : index
    %69 = vector.load %arg9[%c0_32, %c0_33, %c0_34] : memref<1x32x32xf32, #tpu.memory_space<vmem>>, vector<1x32x32xf32>
    %70 = vector.shape_cast %69 : vector<1x32x32xf32> to vector<32x32xf32>
    %cst_35 = arith.constant dense<0.000000e+00> : vector<8x32xf32>
    %71 = tpu.matmul %68, %70, %cst_35 {dimension_numbers = #tpu.dot_dimension_numbers<[1], [0], [0], [1], [0, 0, 1, 1], [], []>} : vector<8x32xf32>, vector<32x32xf32>, vector<8x32xf32> -> vector<8x32xf32>
    %c0_36 = arith.constant 0 : index
    %c0_37 = arith.constant 0 : index
    %c0_38 = arith.constant 0 : index
    %72 = vector.load %arg10[%c0_36, %c0_37, %c0_38] : memref<1x32x32xf32, #tpu.memory_space<vmem>>, vector<1x32x32xf32>
    %73 = vector.shape_cast %72 : vector<1x32x32xf32> to vector<32x32xf32>
    %cst_39 = arith.constant dense<0.000000e+00> : vector<8x32xf32>
    %74 = tpu.matmul %71, %73, %cst_39 {dimension_numbers = #tpu.dot_dimension_numbers<[1], [0], [0], [1], [0, 0, 1, 1], [], []>} : vector<8x32xf32>, vector<32x32xf32>, vector<8x32xf32> -> vector<8x32xf32>
    %75 = arith.negf %71 : vector<8x32xf32>
    %76 = math.exp %75 : vector<8x32xf32>
    %cst_40 = arith.constant 1.000000e+00 : f32
    %77 = vector.broadcast %cst_40 : f32 to vector<8x32xf32>
    %78 = arith.addf %77, %76 : vector<8x32xf32>
    %79 = arith.divf %77, %78 : vector<8x32xf32>
    %80 = arith.mulf %71, %79 : vector<8x32xf32>
    %81 = arith.mulf %80, %74 : vector<8x32xf32>
    %c0_41 = arith.constant 0 : index
    %c0_42 = arith.constant 0 : index
    %c0_43 = arith.constant 0 : index
    %82 = vector.load %arg11[%c0_41, %c0_42, %c0_43] : memref<1x32x32xf32, #tpu.memory_space<vmem>>, vector<1x32x32xf32>
    %83 = vector.shape_cast %82 : vector<1x32x32xf32> to vector<32x32xf32>
    %cst_44 = arith.constant dense<0.000000e+00> : vector<8x32xf32>
    %84 = tpu.matmul %81, %83, %cst_44 {dimension_numbers = #tpu.dot_dimension_numbers<[1], [0], [0], [1], [0, 0, 1, 1], [], []>} : vector<8x32xf32>, vector<32x32xf32>, vector<8x32xf32> -> vector<8x32xf32>
    %85 = arith.addf %84, %3 : vector<8x32xf32>
    %c0_45 = arith.constant 0 : index
    %c0_46 = arith.constant 0 : index
    %86 = vector.load %arg15[%c0_45, %c0_46] : memref<8x32xf32, #tpu.memory_space<vmem>>, vector<8x32xf32>
    tpu.vector_store %arg15[%c0_45, %c0_46], %85 {strides = array<i32>} : memref<8x32xf32, #tpu.memory_space<vmem>>, vector<8x32xf32>,
    %c1_i32 = arith.constant 1 : i32
    %87 = arith.cmpi eq, %arg1, %c1_i32 : i32
    %88 = arith.extui %87 : i1 to i32
    %c0_i32_47 = arith.constant 0 : i32
    %89 = arith.cmpi ne, %88, %c0_i32_47 : i32
    scf.if %89 {
      %c0_48 = arith.constant 0 : index
      %c0_49 = arith.constant 0 : index
      %90 = vector.load %arg12[%c0_48, %c0_49] : memref<1x32xf32, #tpu.memory_space<vmem>>, vector<1x32xf32>
      %91 = arith.mulf %85, %85 : vector<8x32xf32>
      %cst_50 = arith.constant dense<0.000000e+00> : vector<8xf32>
      %92 = vector.multi_reduction <add>, %91, %cst_50 [1] : vector<8x32xf32> to vector<8xf32>
      %93 = vector.shape_cast %92 : vector<8xf32> to vector<8x1xf32>
      %cst_51 = arith.constant 3.200000e+01 : f32
      %94 = vector.broadcast %cst_51 : f32 to vector<8x1xf32>
      %95 = arith.divf %93, %94 : vector<8x1xf32>
      %cst_52 = arith.constant 9.99999974E-6 : f32
      %96 = vector.broadcast %cst_52 : f32 to vector<8x1xf32>
      %97 = arith.addf %95, %96 : vector<8x1xf32>
      %98 = math.rsqrt %97 : vector<8x1xf32>
      %99 = vector.broadcast %98 : vector<8x1xf32> to vector<8x32xf32>
      %100 = arith.mulf %85, %99 : vector<8x32xf32>
      %101 = vector.broadcast %90 : vector<1x32xf32> to vector<8x32xf32>
      %102 = arith.mulf %101, %100 : vector<8x32xf32>
      %c0_53 = arith.constant 0 : index
      %c0_54 = arith.constant 0 : index
      %103 = vector.load %arg13[%c0_53, %c0_54] : memref<32x128xf32, #tpu.memory_space<vmem>>, vector<32x128xf32>
      %cst_55 = arith.constant dense<0.000000e+00> : vector<8x128xf32>
      %104 = tpu.matmul %102, %103, %cst_55 {dimension_numbers = #tpu.dot_dimension_numbers<[1], [0], [0], [1], [0, 0, 1, 1], [], []>} : vector<8x32xf32>, vector<32x128xf32>, vector<8x128xf32> -> vector<8x128xf32>
      %c0_56 = arith.constant 0 : index
      %c0_57 = arith.constant 0 : index
      %c0_58 = arith.constant 0 : index
      %105 = vector.load %arg14[%c0_56, %c0_57, %c0_58] : memref<1x8x128xf32, #tpu.memory_space<vmem>>, vector<1x8x128xf32>
      %106 = vector.shape_cast %105 : vector<1x8x128xf32> to vector<8x128xf32>
      %107 = vector.shape_cast %104 : vector<8x128xf32> to vector<1x8x128xf32>
      tpu.vector_store %arg14[%c0_56, %c0_57, %c0_58], %107 {strides = array<i32>} : memref<1x8x128xf32, #tpu.memory_space<vmem>>, vector<1x8x128xf32>,
    } else {
    }
    return
  }
  func.func @transform_0(%arg0: i32, %arg1: i32) -> (i32, i32, i32) {
    %c0_i32 = arith.constant 0 : i32
    %c0_i32_0 = arith.constant 0 : i32
    %c0_i32_1 = arith.constant 0 : i32
    return %arg0, %c0_i32, %c0_i32_0 : i32, i32, i32
  }
  func.func @transform_1(%arg0: i32, %arg1: i32) -> (i32, i32, i32) {
    %c0_i32 = arith.constant 0 : i32
    %c0_i32_0 = arith.constant 0 : i32
    %c0_i32_1 = arith.constant 0 : i32
    return %arg1, %c0_i32, %c0_i32_0 : i32, i32, i32
  }
  func.func @transform_2(%arg0: i32, %arg1: i32) -> (i32, i32, i32) {
    %c0_i32 = arith.constant 0 : i32
    %c0_i32_0 = arith.constant 0 : i32
    %c0_i32_1 = arith.constant 0 : i32
    return %arg1, %c0_i32, %c0_i32_0 : i32, i32, i32
  }
  func.func @transform_3(%arg0: i32, %arg1: i32) -> (i32, i32, i32) {
    %c0_i32 = arith.constant 0 : i32
    %c0_i32_0 = arith.constant 0 : i32
    %c0_i32_1 = arith.constant 0 : i32
    return %arg1, %c0_i32, %c0_i32_0 : i32, i32, i32
  }
  func.func @transform_4(%arg0: i32, %arg1: i32) -> (i32, i32, i32) {
    %c0_i32 = arith.constant 0 : i32
    %c0_i32_0 = arith.constant 0 : i32
    %c0_i32_1 = arith.constant 0 : i32
    return %arg1, %c0_i32, %c0_i32_0 : i32, i32, i32
  }
  func.func @transform_5(%arg0: i32, %arg1: i32) -> (i32, i32, i32) {
    %c0_i32 = arith.constant 0 : i32
    %c0_i32_0 = arith.constant 0 : i32
    %c0_i32_1 = arith.constant 0 : i32
    return %arg1, %c0_i32, %c0_i32_0 : i32, i32, i32
  }
  func.func @transform_6(%arg0: i32, %arg1: i32) -> (i32, i32, i32) {
    %c0_i32 = arith.constant 0 : i32
    %c0_i32_0 = arith.constant 0 : i32
    %c0_i32_1 = arith.constant 0 : i32
    return %arg1, %c0_i32, %c0_i32_0 : i32, i32, i32
  }
  func.func @transform_7(%arg0: i32, %arg1: i32) -> (i32, i32, i32) {
    %c0_i32 = arith.constant 0 : i32
    %c0_i32_0 = arith.constant 0 : i32
    %c0_i32_1 = arith.constant 0 : i32
    return %arg1, %c0_i32, %c0_i32_0 : i32, i32, i32
  }
  func.func @transform_8(%arg0: i32, %arg1: i32) -> (i32, i32, i32) {
    %c0_i32 = arith.constant 0 : i32
    %c0_i32_0 = arith.constant 0 : i32
    %c0_i32_1 = arith.constant 0 : i32
    return %arg1, %c0_i32, %c0_i32_0 : i32, i32, i32
  }
  func.func @transform_9(%arg0: i32, %arg1: i32) -> (i32, i32, i32) {
    %c0_i32 = arith.constant 0 : i32
    %c0_i32_0 = arith.constant 0 : i32
    %c0_i32_1 = arith.constant 0 : i32
    return %arg1, %c0_i32, %c0_i32_0 : i32, i32, i32
  }
  func.func @transform_10(%arg0: i32, %arg1: i32) -> (i32, i32) {
    %c0_i32 = arith.constant 0 : i32
    %c0_i32_0 = arith.constant 0 : i32
    %c0_i32_1 = arith.constant 0 : i32
    return %c0_i32, %c0_i32_0 : i32, i32
  }
  func.func @transform_11(%arg0: i32, %arg1: i32) -> (i32, i32) {
    %c0_i32 = arith.constant 0 : i32
    %c0_i32_0 = arith.constant 0 : i32
    %c0_i32_1 = arith.constant 0 : i32
    return %c0_i32, %c0_i32_0 : i32, i32
  }
  func.func @transform_12(%arg0: i32, %arg1: i32) -> (i32, i32, i32) {
    %c0_i32 = arith.constant 0 : i32
    %c0_i32_0 = arith.constant 0 : i32
    %c0_i32_1 = arith.constant 0 : i32
    return %arg0, %c0_i32, %c0_i32_0 : i32, i32, i32
  }
}

</mosaic_0001>

<llo_original>
// kernel: llama2_forward.1
$region0: #{llama2_forward.1}
  #allocation0 [shape = 'u32[]', space=smem, size = 0x4, offset = 0x4, fixed_abs, tag = 'smem constant byte address 0x4 - core index']
  #allocation1 [shape = 'u32[72,128]{1,0:T(1,128)}', space=vmem, size = 0x9000, scoped, tag = 'internal scratch']
  #allocation2 [shape = 'f32[8,32]{1,0:T(8,128)}', space=vmem, size = 0x1000, scoped, tag = 'scratch operand']
  %s0 = inlined_call_operand.vmem [shape: f32[2,8,32], index: 0, kind: input, shape index: {}]
  %s1 = inlined_call_operand.vmem [shape: f32[2,1,32], index: 1, kind: input, shape index: {}]
  %s2 = inlined_call_operand.vmem [shape: f32[2,32,96], index: 2, kind: input, shape index: {}]
  %s3 = inlined_call_operand.hbm [shape: f32[2,1,96], index: 3, kind: input, shape index: {}]
  %s4 = inlined_call_operand.vmem [shape: f32[2,32,32], index: 4, kind: input, shape index: {}]
  %s5 = inlined_call_operand.hbm [shape: f32[2,1,32], index: 5, kind: input, shape index: {}]
  %s6 = inlined_call_operand.vmem [shape: f32[2,1,32], index: 6, kind: input, shape index: {}]
  %s7 = inlined_call_operand.vmem [shape: f32[2,32,32], index: 7, kind: input, shape index: {}]
  %s8 = inlined_call_operand.vmem [shape: f32[2,32,32], index: 8, kind: input, shape index: {}]
  %s9 = inlined_call_operand.vmem [shape: f32[2,32,32], index: 9, kind: input, shape index: {}]
  %s10 = inlined_call_operand.hbm [shape: f32[1,32], index: 10, kind: input, shape index: {}]
  %s11 = inlined_call_operand.hbm [shape: f32[32,128], index: 11, kind: input, shape index: {}]
  %s12 = inlined_call_operand.hbm [shape: f32[2,8,128], index: 12, kind: output, shape index: {}]
  %s13 = sld [smem:[#allocation0]]
  $region105: #{llama2_forward.1} parent=0
    _
  %s15 = ssub.s32 1, %s13
  %s16 = scalar_select 0, %s15, %s13
  $region1: #{llama2_forward.1} parent=0
    #allocation3 [shape = 'u8[1024]{0}', space=vmem, size = 0x400, scoped, tag = 'input window, operand 3']
    #allocation4 [shape = 's32[2]{0}', space=sflag, size = 0x8, scoped, tag = 'scoped memory for llama2_forward.1']
    #allocation5 [shape = 's32[2]{0}', space=sflag, size = 0x8, scoped, tag = 'scoped memory for llama2_forward.1']
    #allocation6 [shape = 'u8[1024]{0}', space=vmem, size = 0x400, scoped, tag = 'input window, operand 5']
    #allocation7 [shape = 's32[2]{0}', space=sflag, size = 0x8, scoped, tag = 'scoped memory for llama2_forward.1']
    #allocation8 [shape = 'u8[512]{0}', space=vmem, size = 0x400, scoped, tag = 'input window, operand 10, single buffered']
    #allocation9 [shape = 'u8[16384]{0}', space=vmem, size = 0x4000, scoped, tag = 'input window, operand 11, single buffered']
    #allocation10 [shape = 's32[1]{0}', space=sflag, size = 0x4, scoped, tag = 'scoped memory for llama2_forward.1']
    #allocation11 [shape = 'u8[8192]{0}', space=vmem, size = 0x2000, scoped, tag = 'output window, operand 0']
    %17 = vsyncpa [#allocation4], 0
    %s18 = scalar_lea.sflag [#allocation4], 1
    %19 = vsyncpa %s18, 0
    %20 = vsyncpa [#allocation7], 0
    %s21 = scalar_lea.sflag [#allocation7], 1
    %22 = vsyncpa %s21, 0
    %23 = vsyncpa [#allocation10], 0
    %24 = vsyncpa [#allocation5], 0
    %s25 = scalar_lea.sflag [#allocation5], 1
    %26 = vsyncpa %s25, 0
    loop: start=0, step=1, limit=6
    $region2: #{llama2_forward.1} parent=1 // loop_pre_header
      _
    $region3: #{llama2_forward.1} parent=1 // loop_header
      %s28 = sphi 0, %s32
      %p29 = scmp.ge.s32.totalorder %s28, 6
      %s35 = sphi 0, %s47
      %s36 = sphi 0, %s43
      %s37 = sphi 0, %s35
      %s38 = sphi 0, %s36
      %s39 = sphi 0, %s37
      %s40 = sphi 0, %s38
      %s50 = sphi 0, %s52
      %s53 = sphi 0, %s50
      %s54 = sphi 0, %s53
      %s70 = sphi 0, %s54
      %s76 = sphi 0, %s78
      %s79 = sphi 0, %s76
      %s80 = sphi 0, %s79
      %s96 = sphi 0, %s80
      %s102 = sphi 0, %s104
      %s105 = sphi 0, %s102
      %s106 = sphi 0, %s105
      %s122 = sphi 0, %s106
      %s128 = sphi 0, %s130
      %s131 = sphi 0, %s128
      %s132 = sphi 0, %s131
      %s148 = sphi 0, %s132
      %s154 = sphi 0, %s156
      %s157 = sphi 0, %s154
      %s158 = sphi 0, %s157
      %s174 = sphi 0, %s158
      %s180 = sphi 0, %s182
      %s183 = sphi 0, %s180
      %s184 = sphi 0, %s183
      %s200 = sphi 0, %s184
      %s206 = sphi 0, %s208
      %s209 = sphi 0, %s206
      %s210 = sphi 0, %s209
      %s226 = sphi 0, %s210
      %s232 = sphi 0, %s234
      %s235 = sphi 0, %s232
      %s236 = sphi 0, %s235
      %s252 = sphi 0, %s236
      %s258 = sphi 0, %s260
      %s261 = sphi 0, %s258
      %s262 = sphi 0, %s261
      %s278 = sphi 0, %s262
      %s284 = sphi 0, %s286
      %s287 = sphi 0, %s284
      %s288 = sphi 0, %s287
      %s304 = sphi 0, %s288
      %s308 = sphi 0, %s308
      %s310 = sphi 0, %s308
      %s311 = sphi 0, %s310
      %s325 = sphi 0, %s311
      %s329 = sphi 0, %s329
      %s331 = sphi 0, %s329
      %s332 = sphi 0, %s331
      %s346 = sphi 0, %s332
      %s352 = sphi 0, %s354
      %s355 = sphi 0, %s352
      %s356 = sphi 0, %s355
      %s372 = sphi 0, %s356
    $region4: #{llama2_forward.1} parent=1 // loop_header_branch
      %31 = sbr.rel (%p29) target = $region8
    $region5: #{llama2_forward.1} parent=1 // loop_body
      %s33 = ssub.s32 %s28, 1
      %s34 = ssub.s32 %s28, 2
      %s41 = sadd.s32 1, %s36
      %p42 = scmp.ge.s32.totalorder %s41, 2
      %s43 = scalar_select %p42, 0, %s41
      %s44 = sadd.s32 1, %s35
      %s45 = scalar_select %p42, %s44, %s35
      %p46 = scmp.ge.s32.totalorder %s45, 2
      %s47 = scalar_select %p46, 0, %s45
      %s48 = ssub.s32 %s35, %s47
      %p49 = scmp.eq.s32.totalorder %s48, 0
      %s51 = sadd.s32 %s50, 1
      %s52 = scalar_select %p49, %s50, %s51
      %p55 = pneg %p49
      %p56 = scmp.eq.s32.totalorder %s28, 3
      %p57 = por %p55, %p56
      %p58 = scmp.ne.s32.totalorder %s50, %s53
      %p59 = scmp.eq.s32.totalorder %s28, 0
      %p60 = por %p58, %p59
      %p61 = scmp.ne.s32.totalorder %s50, %s53
      %p62 = scmp.eq.s32.totalorder %s33, 3
      %p63 = por %p61, %p62
      %p64 = scmp.ne.s32.totalorder %s53, %s54
      %p65 = scmp.eq.s32.totalorder %s33, 0
      %p66 = por %p64, %p65
      %p67 = scmp.ne.s32.totalorder %s53, %s54
      %p68 = scmp.eq.s32.totalorder %s34, 3
      %p69 = por %p67, %p68
      %p71 = scmp.ne.s32.totalorder %s54, %s70
      %p72 = scmp.eq.s32.totalorder %s34, 0
      %p73 = por %p71, %p72
      %s74 = ssub.s32 %s36, %s43
      %p75 = scmp.eq.s32.totalorder %s74, 0
      %s77 = sadd.s32 %s76, 1
      %s78 = scalar_select %p75, %s76, %s77
      %p81 = pneg %p75
      %p82 = scmp.eq.s32.totalorder %s28, 3
      %p83 = por %p81, %p82
      %p84 = scmp.ne.s32.totalorder %s76, %s79
      %p85 = scmp.eq.s32.totalorder %s28, 0
      %p86 = por %p84, %p85
      %p87 = scmp.ne.s32.totalorder %s76, %s79
      %p88 = scmp.eq.s32.totalorder %s33, 3
      %p89 = por %p87, %p88
      %p90 = scmp.ne.s32.totalorder %s79, %s80
      %p91 = scmp.eq.s32.totalorder %s33, 0
      %p92 = por %p90, %p91
      %p93 = scmp.ne.s32.totalorder %s79, %s80
      %p94 = scmp.eq.s32.totalorder %s34, 3
      %p95 = por %p93, %p94
      %p97 = scmp.ne.s32.totalorder %s80, %s96
      %p98 = scmp.eq.s32.totalorder %s34, 0
      %p99 = por %p97, %p98
      %s100 = ssub.s32 %s36, %s43
      %p101 = scmp.eq.s32.totalorder %s100, 0
      %s103 = sadd.s32 %s102, 1
      %s104 = scalar_select %p101, %s102, %s103
      %p107 = pneg %p101
      %p108 = scmp.eq.s32.totalorder %s28, 3
      %p109 = por %p107, %p108
      %p110 = scmp.ne.s32.totalorder %s102, %s105
      %p111 = scmp.eq.s32.totalorder %s28, 0
      %p112 = por %p110, %p111
      %p113 = scmp.ne.s32.totalorder %s102, %s105
      %p114 = scmp.eq.s32.totalorder %s33, 3
      %p115 = por %p113, %p114
      %p116 = scmp.ne.s32.totalorder %s105, %s106
      %p117 = scmp.eq.s32.totalorder %s33, 0
      %p118 = por %p116, %p117
      %p119 = scmp.ne.s32.totalorder %s105, %s106
      %p120 = scmp.eq.s32.totalorder %s34, 3
      %p121 = por %p119, %p120
      %p123 = scmp.ne.s32.totalorder %s106, %s122
      %p124 = scmp.eq.s32.totalorder %s34, 0
      %p125 = por %p123, %p124
      %s126 = ssub.s32 %s36, %s43
      %p127 = scmp.eq.s32.totalorder %s126, 0
      %s129 = sadd.s32 %s128, 1
      %s130 = scalar_select %p127, %s128, %s129
      %p133 = pneg %p127
      %p134 = scmp.eq.s32.totalorder %s28, 3
      %p135 = por %p133, %p134
      %p136 = scmp.ne.s32.totalorder %s128, %s131
      %p137 = scmp.eq.s32.totalorder %s28, 0
      %p138 = por %p136, %p137
      %p139 = scmp.ne.s32.totalorder %s128, %s131
      %p140 = scmp.eq.s32.totalorder %s33, 3
      %p141 = por %p139, %p140
      %p142 = scmp.ne.s32.totalorder %s131, %s132
      %p143 = scmp.eq.s32.totalorder %s33, 0
      %p144 = por %p142, %p143
      %p145 = scmp.ne.s32.totalorder %s131, %s132
      %p146 = scmp.eq.s32.totalorder %s34, 3
      %p147 = por %p145, %p146
      %p149 = scmp.ne.s32.totalorder %s132, %s148
      %p150 = scmp.eq.s32.totalorder %s34, 0
      %p151 = por %p149, %p150
      %s152 = ssub.s32 %s36, %s43
      %p153 = scmp.eq.s32.totalorder %s152, 0
      %s155 = sadd.s32 %s154, 1
      %s156 = scalar_select %p153, %s154, %s155
      %p159 = pneg %p153
      %p160 = scmp.eq.s32.totalorder %s28, 3
      %p161 = por %p159, %p160
      %p162 = scmp.ne.s32.totalorder %s154, %s157
      %p163 = scmp.eq.s32.totalorder %s28, 0
      %p164 = por %p162, %p163
      %p165 = scmp.ne.s32.totalorder %s154, %s157
      %p166 = scmp.eq.s32.totalorder %s33, 3
      %p167 = por %p165, %p166
      %p168 = scmp.ne.s32.totalorder %s157, %s158
      %p169 = scmp.eq.s32.totalorder %s33, 0
      %p170 = por %p168, %p169
      %p171 = scmp.ne.s32.totalorder %s157, %s158
      %p172 = scmp.eq.s32.totalorder %s34, 3
      %p173 = por %p171, %p172
      %p175 = scmp.ne.s32.totalorder %s158, %s174
      %p176 = scmp.eq.s32.totalorder %s34, 0
      %p177 = por %p175, %p176
      %s178 = ssub.s32 %s36, %s43
      %p179 = scmp.eq.s32.totalorder %s178, 0
      %s181 = sadd.s32 %s180, 1
      %s182 = scalar_select %p179, %s180, %s181
      %p185 = pneg %p179
      %p186 = scmp.eq.s32.totalorder %s28, 3
      %p187 = por %p185, %p186
      %p188 = scmp.ne.s32.totalorder %s180, %s183
      %p189 = scmp.eq.s32.totalorder %s28, 0
      %p190 = por %p188, %p189
      %p191 = scmp.ne.s32.totalorder %s180, %s183
      %p192 = scmp.eq.s32.totalorder %s33, 3
      %p193 = por %p191, %p192
      %p194 = scmp.ne.s32.totalorder %s183, %s184
      %p195 = scmp.eq.s32.totalorder %s33, 0
      %p196 = por %p194, %p195
      %p197 = scmp.ne.s32.totalorder %s183, %s184
      %p198 = scmp.eq.s32.totalorder %s34, 3
      %p199 = por %p197, %p198
      %p201 = scmp.ne.s32.totalorder %s184, %s200
      %p202 = scmp.eq.s32.totalorder %s34, 0
      %p203 = por %p201, %p202
      %s204 = ssub.s32 %s36, %s43
      %p205 = scmp.eq.s32.totalorder %s204, 0
      %s207 = sadd.s32 %s206, 1
      %s208 = scalar_select %p205, %s206, %s207
      %p211 = pneg %p205
      %p212 = scmp.eq.s32.totalorder %s28, 3
      %p213 = por %p211, %p212
      %p214 = scmp.ne.s32.totalorder %s206, %s209
      %p215 = scmp.eq.s32.totalorder %s28, 0
      %p216 = por %p214, %p215
      %p217 = scmp.ne.s32.totalorder %s206, %s209
      %p218 = scmp.eq.s32.totalorder %s33, 3
      %p219 = por %p217, %p218
      %p220 = scmp.ne.s32.totalorder %s209, %s210
      %p221 = scmp.eq.s32.totalorder %s33, 0
      %p222 = por %p220, %p221
      %p223 = scmp.ne.s32.totalorder %s209, %s210
      %p224 = scmp.eq.s32.totalorder %s34, 3
      %p225 = por %p223, %p224
      %p227 = scmp.ne.s32.totalorder %s210, %s226
      %p228 = scmp.eq.s32.totalorder %s34, 0
      %p229 = por %p227, %p228
      %s230 = ssub.s32 %s36, %s43
      %p231 = scmp.eq.s32.totalorder %s230, 0
      %s233 = sadd.s32 %s232, 1
      %s234 = scalar_select %p231, %s232, %s233
      %p237 = pneg %p231
      %p238 = scmp.eq.s32.totalorder %s28, 3
      %p239 = por %p237, %p238
      %p240 = scmp.ne.s32.totalorder %s232, %s235
      %p241 = scmp.eq.s32.totalorder %s28, 0
      %p242 = por %p240, %p241
      %p243 = scmp.ne.s32.totalorder %s232, %s235
      %p244 = scmp.eq.s32.totalorder %s33, 3
      %p245 = por %p243, %p244
      %p246 = scmp.ne.s32.totalorder %s235, %s236
      %p247 = scmp.eq.s32.totalorder %s33, 0
      %p248 = por %p246, %p247
      %p249 = scmp.ne.s32.totalorder %s235, %s236
      %p250 = scmp.eq.s32.totalorder %s34, 3
      %p251 = por %p249, %p250
      %p253 = scmp.ne.s32.totalorder %s236, %s252
      %p254 = scmp.eq.s32.totalorder %s34, 0
      %p255 = por %p253, %p254
      %s256 = ssub.s32 %s36, %s43
      %p257 = scmp.eq.s32.totalorder %s256, 0
      %s259 = sadd.s32 %s258, 1
      %s260 = scalar_select %p257, %s258, %s259
      %p263 = pneg %p257
      %p264 = scmp.eq.s32.totalorder %s28, 3
      %p265 = por %p263, %p264
      %p266 = scmp.ne.s32.totalorder %s258, %s261
      %p267 = scmp.eq.s32.totalorder %s28, 0
      %p268 = por %p266, %p267
      %p269 = scmp.ne.s32.totalorder %s258, %s261
      %p270 = scmp.eq.s32.totalorder %s33, 3
      %p271 = por %p269, %p270
      %p272 = scmp.ne.s32.totalorder %s261, %s262
      %p273 = scmp.eq.s32.totalorder %s33, 0
      %p274 = por %p272, %p273
      %p275 = scmp.ne.s32.totalorder %s261, %s262
      %p276 = scmp.eq.s32.totalorder %s34, 3
      %p277 = por %p275, %p276
      %p279 = scmp.ne.s32.totalorder %s262, %s278
      %p280 = scmp.eq.s32.totalorder %s34, 0
      %p281 = por %p279, %p280
      %s282 = ssub.s32 %s36, %s43
      %p283 = scmp.eq.s32.totalorder %s282, 0
      %s285 = sadd.s32 %s284, 1
      %s286 = scalar_select %p283, %s284, %s285
      %p289 = pneg %p283
      %p290 = scmp.eq.s32.totalorder %s28, 3
      %p291 = por %p289, %p290
      %p292 = scmp.ne.s32.totalorder %s284, %s287
      %p293 = scmp.eq.s32.totalorder %s28, 0
      %p294 = por %p292, %p293
      %p295 = scmp.ne.s32.totalorder %s284, %s287
      %p296 = scmp.eq.s32.totalorder %s33, 3
      %p297 = por %p295, %p296
      %p298 = scmp.ne.s32.totalorder %s287, %s288
      %p299 = scmp.eq.s32.totalorder %s33, 0
      %p300 = por %p298, %p299
      %p301 = scmp.ne.s32.totalorder %s287, %s288
      %p302 = scmp.eq.s32.totalorder %s34, 3
      %p303 = por %p301, %p302
      %p305 = scmp.ne.s32.totalorder %s288, %s304
      %p306 = scmp.eq.s32.totalorder %s34, 0
      %p307 = por %p305, %p306
      %s309 = sadd.s32 %s308, 1
      %p312 = scmp.eq.s32.totalorder %s28, 3
      %p313 = scmp.ne.s32.totalorder %s308, %s310
      %p314 = scmp.eq.s32.totalorder %s28, 0
      %p315 = por %p313, %p314
      %p316 = scmp.ne.s32.totalorder %s308, %s310
      %p317 = scmp.eq.s32.totalorder %s33, 3
      %p318 = por %p316, %p317
      %p319 = scmp.ne.s32.totalorder %s310, %s311
      %p320 = scmp.eq.s32.totalorder %s33, 0
      %p321 = por %p319, %p320
      %p322 = scmp.ne.s32.totalorder %s310, %s311
      %p323 = scmp.eq.s32.totalorder %s34, 3
      %p324 = por %p322, %p323
      %p326 = scmp.ne.s32.totalorder %s311, %s325
      %p327 = scmp.eq.s32.totalorder %s34, 0
      %p328 = por %p326, %p327
      %s330 = sadd.s32 %s329, 1
      %p333 = scmp.eq.s32.totalorder %s28, 3
      %p334 = scmp.ne.s32.totalorder %s329, %s331
      %p335 = scmp.eq.s32.totalorder %s28, 0
      %p336 = por %p334, %p335
      %p337 = scmp.ne.s32.totalorder %s329, %s331
      %p338 = scmp.eq.s32.totalorder %s33, 3
      %p339 = por %p337, %p338
      %p340 = scmp.ne.s32.totalorder %s331, %s332
      %p341 = scmp.eq.s32.totalorder %s33, 0
      %p342 = por %p340, %p341
      %p343 = scmp.ne.s32.totalorder %s331, %s332
      %p344 = scmp.eq.s32.totalorder %s34, 3
      %p345 = por %p343, %p344
      %p347 = scmp.ne.s32.totalorder %s332, %s346
      %p348 = scmp.eq.s32.totalorder %s34, 0
      %p349 = por %p347, %p348
      %s350 = ssub.s32 %s35, %s47
      %p351 = scmp.eq.s32.totalorder %s350, 0
      %s353 = sadd.s32 %s352, 1
      %s354 = scalar_select %p351, %s352, %s353
      %p357 = pneg %p351
      %p358 = scmp.eq.s32.totalorder %s28, 3
      %p359 = por %p357, %p358
      %p360 = scmp.ne.s32.totalorder %s352, %s355
      %p361 = scmp.eq.s32.totalorder %s28, 0
      %p362 = por %p360, %p361
      %p363 = scmp.ne.s32.totalorder %s352, %s355
      %p364 = scmp.eq.s32.totalorder %s33, 3
      %p365 = por %p363, %p364
      %p366 = scmp.ne.s32.totalorder %s355, %s356
      %p367 = scmp.eq.s32.totalorder %s33, 0
      %p368 = por %p366, %p367
      %p369 = scmp.ne.s32.totalorder %s355, %s356
      %p370 = scmp.eq.s32.totalorder %s34, 3
      %p371 = por %p369, %p370
      %p373 = scmp.ne.s32.totalorder %s356, %s372
      %p374 = scmp.eq.s32.totalorder %s34, 0
      %p375 = por %p373, %p374
      %p376 = scmp.le.s32.totalorder 1, %s28
      %p377 = scmp.lt.s32.totalorder %s28, 5
      %p378 = pnand %p376, %p377
      %p379 = pneg %p378
      // Predicated region
      $region9: #{llama2_forward.1} parent=5 // pred_check
        _
      $region10: #{llama2_forward.1} parent=5 // pred_check_branch
        %381 = sbr.rel (%p378) target = $region12
      $region11: #{llama2_forward.1} parent=5 // pred_region
        %s382 = ssub.s32 %s28, 1
        // Predicated region
        $region13: #{llama2_forward.1} parent=11 // pred_check
          %p383 = pneg %p321
        $region14: #{llama2_forward.1} parent=11 // pred_check_branch
          %385 = sbr.rel (%p383) target = $region16
        $region15: #{llama2_forward.1} parent=11 // pred_region
          %387 = vsyncadd [#allocation7], 0
          %s389 = sshll.u32 %s10, 4
          %s390 = int_to_ptr.hbm [resolvable:$true] %s389
          %s391 = sshll.u32 [#allocation8], 4
          %s392 = int_to_ptr.vmem [resolvable:$true] %s391
          %394 = dma.hbm_to_vmem [thread:$0]  %s390, 16, %s392, [#allocation7]
        $region16: #{llama2_forward.1} parent=11 // pred_fallthru
          _
        // Predicated region
        $region17: #{llama2_forward.1} parent=11 // pred_check
          %p395 = pneg %p342
        $region18: #{llama2_forward.1} parent=11 // pred_check_branch
          %397 = sbr.rel (%p395) target = $region20
        $region19: #{llama2_forward.1} parent=11 // pred_region
          %399 = vsyncadd [#allocation10], 0
          %s400 = sshll.u32 %s11, 4
          %s401 = int_to_ptr.hbm [resolvable:$true] %s400
          %s402 = sshll.u32 [#allocation9], 4
          %s403 = int_to_ptr.vmem [resolvable:$true] %s402
          %408 = dma.hbm_to_vmem [thread:$0]  %s401, 512, %s403, [#allocation10], 128, 128, 8
        $region20: #{llama2_forward.1} parent=11 // pred_fallthru
          _
      $region12: #{llama2_forward.1} parent=5 // pred_fallthru
        _
      %p409 = scmp.lt.s32.totalorder %s28, 4
      // Predicated region
      $region21: #{llama2_forward.1} parent=5 // pred_check
        %p410 = pneg %p409
      $region22: #{llama2_forward.1} parent=5 // pred_check_branch
        %412 = sbr.rel (%p410) target = $region24
      $region23: #{llama2_forward.1} parent=5 // pred_region
        // Predicated region
        $region25: #{llama2_forward.1} parent=23 // pred_check
          %p413 = pneg %p60
        $region26: #{llama2_forward.1} parent=23 // pred_check_branch
          %415 = sbr.rel (%p413) target = $region28
        $region27: #{llama2_forward.1} parent=23 // pred_region
          %p416 = scmp.lt.s32.totalorder %s35, 1
          %s417 = scalar_select %p416, %s35, 1
          %s418 = smul.addr %s417, 8
          %s419 = scalar_lea.vmem %s0, %s418
        $region28: #{llama2_forward.1} parent=23 // pred_fallthru
          _
        // Predicated region
        $region29: #{llama2_forward.1} parent=23 // pred_check
          %p420 = pneg %p86
        $region30: #{llama2_forward.1} parent=23 // pred_check_branch
          %422 = sbr.rel (%p420) target = $region32
        $region31: #{llama2_forward.1} parent=23 // pred_region
          %p423 = scmp.lt.s32.totalorder %s36, 1
          %s424 = scalar_select %p423, %s36, 1
          %s425 = scalar_lea.vmem %s1, %s424
        $region32: #{llama2_forward.1} parent=23 // pred_fallthru
          _
        // Predicated region
        $region33: #{llama2_forward.1} parent=23 // pred_check
          %p426 = pneg %p112
        $region34: #{llama2_forward.1} parent=23 // pred_check_branch
          %428 = sbr.rel (%p426) target = $region36
        $region35: #{llama2_forward.1} parent=23 // pred_region
          %p429 = scmp.lt.s32.totalorder %s36, 1
          %s430 = scalar_select %p429, %s36, 1
          %s431 = smul.addr %s430, 4
          %s432 = smul.addr %s431, 8
          %s433 = scalar_lea.vmem %s2, %s432
        $region36: #{llama2_forward.1} parent=23 // pred_fallthru
          _
        // Predicated region
        $region37: #{llama2_forward.1} parent=23 // pred_check
          %p434 = pneg %p138
        $region38: #{llama2_forward.1} parent=23 // pred_check_branch
          %436 = sbr.rel (%p434) target = $region40
        $region39: #{llama2_forward.1} parent=23 // pred_region
          %s437 = sand.u32 %s128, 1
          %s438 = scalar_lea.sflag [#allocation4], %s437
          %s439 = sand.u32 %s128, 1
          %s440 = scalar_lea.vmem [#allocation3], %s439
          %442 = vsyncadd %s438, 0
          %s443 = scalar_lea.hbm %s3, %s36
          %s445 = sshll.u32 %s443, 4
          %s446 = int_to_ptr.hbm [resolvable:$true] %s445
          %s447 = sshll.u32 %s440, 4
          %s448 = int_to_ptr.vmem [resolvable:$true] %s447
          %450 = dma.hbm_to_vmem [thread:$0]  %s446, 16, %s448, %s438
        $region40: #{llama2_forward.1} parent=23 // pred_fallthru
          _
        // Predicated region
        $region41: #{llama2_forward.1} parent=23 // pred_check
          %p451 = pneg %p164
        $region42: #{llama2_forward.1} parent=23 // pred_check_branch
          %453 = sbr.rel (%p451) target = $region44
        $region43: #{llama2_forward.1} parent=23 // pred_region
          %p454 = scmp.lt.s32.totalorder %s36, 1
          %s455 = scalar_select %p454, %s36, 1
          %s456 = smul.addr %s455, 4
          %s457 = smul.addr %s456, 8
          %s458 = scalar_lea.vmem %s4, %s457
        $region44: #{llama2_forward.1} parent=23 // pred_fallthru
          _
        // Predicated region
        $region45: #{llama2_forward.1} parent=23 // pred_check
          %p459 = pneg %p190
        $region46: #{llama2_forward.1} parent=23 // pred_check_branch
          %461 = sbr.rel (%p459) target = $region48
        $region47: #{llama2_forward.1} parent=23 // pred_region
          %s462 = sand.u32 %s28, 1
          %s463 = scalar_lea.sflag [#allocation7], %s462
          %s464 = sand.u32 %s180, 1
          %s465 = scalar_lea.vmem [#allocation6], %s464
          %467 = vsyncadd %s463, 0
          %s468 = scalar_lea.hbm %s5, %s36
          %s470 = sshll.u32 %s468, 4
          %s471 = int_to_ptr.hbm [resolvable:$true] %s470
          %s472 = sshll.u32 %s465, 4
          %s473 = int_to_ptr.vmem [resolvable:$true] %s472
          %475 = dma.hbm_to_vmem [thread:$0]  %s471, 16, %s473, %s463
        $region48: #{llama2_forward.1} parent=23 // pred_fallthru
          _
        // Predicated region
        $region49: #{llama2_forward.1} parent=23 // pred_check
          %p476 = pneg %p216
        $region50: #{llama2_forward.1} parent=23 // pred_check_branch
          %478 = sbr.rel (%p476) target = $region52
        $region51: #{llama2_forward.1} parent=23 // pred_region
          %p479 = scmp.lt.s32.totalorder %s36, 1
          %s480 = scalar_select %p479, %s36, 1
          %s481 = scalar_lea.vmem %s6, %s480
        $region52: #{llama2_forward.1} parent=23 // pred_fallthru
          _
        // Predicated region
        $region53: #{llama2_forward.1} parent=23 // pred_check
          %p482 = pneg %p242
        $region54: #{llama2_forward.1} parent=23 // pred_check_branch
          %484 = sbr.rel (%p482) target = $region56
        $region55: #{llama2_forward.1} parent=23 // pred_region
          %p485 = scmp.lt.s32.totalorder %s36, 1
          %s486 = scalar_select %p485, %s36, 1
          %s487 = smul.addr %s486, 4
          %s488 = smul.addr %s487, 8
          %s489 = scalar_lea.vmem %s7, %s488
        $region56: #{llama2_forward.1} parent=23 // pred_fallthru
          _
        // Predicated region
        $region57: #{llama2_forward.1} parent=23 // pred_check
          %p490 = pneg %p268
        $region58: #{llama2_forward.1} parent=23 // pred_check_branch
          %492 = sbr.rel (%p490) target = $region60
        $region59: #{llama2_forward.1} parent=23 // pred_region
          %p493 = scmp.lt.s32.totalorder %s36, 1
          %s494 = scalar_select %p493, %s36, 1
          %s495 = smul.addr %s494, 4
          %s496 = smul.addr %s495, 8
          %s497 = scalar_lea.vmem %s8, %s496
        $region60: #{llama2_forward.1} parent=23 // pred_fallthru
          _
        // Predicated region
        $region61: #{llama2_forward.1} parent=23 // pred_check
          %p498 = pneg %p294
        $region62: #{llama2_forward.1} parent=23 // pred_check_branch
          %500 = sbr.rel (%p498) target = $region64
        $region63: #{llama2_forward.1} parent=23 // pred_region
          %p501 = scmp.lt.s32.totalorder %s36, 1
          %s502 = scalar_select %p501, %s36, 1
          %s503 = smul.addr %s502, 4
          %s504 = smul.addr %s503, 8
          %s505 = scalar_lea.vmem %s9, %s504
        $region64: #{llama2_forward.1} parent=23 // pred_fallthru
          _
      $region24: #{llama2_forward.1} parent=5 // pred_fallthru
        _
      %p506 = scmp.le.s32.totalorder 1, %s28
      %p507 = scmp.lt.s32.totalorder %s28, 5
      %p508 = pnand %p506, %p507
      %p509 = pneg %p508
      // Predicated region
      $region65: #{llama2_forward.1} parent=5 // pred_check
        _
      $region66: #{llama2_forward.1} parent=5 // pred_check_branch
        %511 = sbr.rel (%p508) target = $region68
      $region67: #{llama2_forward.1} parent=5 // pred_region
        %s512 = ssub.s32 %s28, 1
        %s513 = sand.u32 %s131, 1
        %s514 = scalar_lea.sflag [#allocation4], %s513
        %s515 = sand.u32 %s131, 1
        %s516 = scalar_lea.vmem [#allocation3], %s515
        // Predicated region
        $region69: #{llama2_forward.1} parent=67 // pred_check
          %p517 = pneg %p144
        $region70: #{llama2_forward.1} parent=67 // pred_check_branch
          %519 = sbr.rel (%p517) target = $region72
        $region71: #{llama2_forward.1} parent=67 // pred_region
          %521 = dma.done %s514, 16
        $region72: #{llama2_forward.1} parent=67 // pred_fallthru
          _
        %s522 = sand.u32 %s33, 1
        %s523 = scalar_lea.sflag [#allocation7], %s522
        %s524 = sand.u32 %s183, 1
        %s525 = scalar_lea.vmem [#allocation6], %s524
        // Predicated region
        $region73: #{llama2_forward.1} parent=67 // pred_check
          %p526 = pneg %p196
        $region74: #{llama2_forward.1} parent=67 // pred_check_branch
          %528 = sbr.rel (%p526) target = $region76
        $region75: #{llama2_forward.1} parent=67 // pred_region
          %530 = dma.done %s523, 16
        $region76: #{llama2_forward.1} parent=67 // pred_fallthru
          _
        // Predicated region
        $region77: #{llama2_forward.1} parent=67 // pred_check
          %p531 = pneg %p321
        $region78: #{llama2_forward.1} parent=67 // pred_check_branch
          %533 = sbr.rel (%p531) target = $region80
        $region79: #{llama2_forward.1} parent=67 // pred_region
          %535 = dma.done [#allocation7], 16
        $region80: #{llama2_forward.1} parent=67 // pred_fallthru
          _
        // Predicated region
        $region81: #{llama2_forward.1} parent=67 // pred_check
          %p536 = pneg %p342
        $region82: #{llama2_forward.1} parent=67 // pred_check_branch
          %538 = sbr.rel (%p536) target = $region84
        $region83: #{llama2_forward.1} parent=67 // pred_region
          %540 = dma.done [#allocation10], 512
        $region84: #{llama2_forward.1} parent=67 // pred_fallthru
          _
        %p541 = scmp.lt.s32.totalorder %s37, 1
        %s542 = scalar_select %p541, %s37, 1
        %s543 = smul.addr %s542, 8
        %s544 = scalar_lea.vmem %s0, %s543
        %p545 = pneg %p66
        %p546 = pneg %p63
        %p547 = scmp.lt.s32.totalorder %s38, 1
        %s548 = scalar_select %p547, %s38, 1
        %s549 = scalar_lea.vmem %s1, %s548
        %p550 = pneg %p92
        %p551 = pneg %p89
        %p552 = scmp.lt.s32.totalorder %s38, 1
        %s553 = scalar_select %p552, %s38, 1
        %s554 = smul.addr %s553, 4
        %s555 = smul.addr %s554, 8
        %s556 = scalar_lea.vmem %s2, %s555
        %p557 = pneg %p118
        %p558 = pneg %p115
        %s559 = sand.u32 %s131, 1
        %s560 = scalar_lea.sflag [#allocation4], %s559
        %s561 = sand.u32 %s131, 1
        %s562 = scalar_lea.vmem [#allocation3], %s561
        %p563 = pneg %p144
        %p564 = pneg %p141
        %p565 = scmp.lt.s32.totalorder %s38, 1
        %s566 = scalar_select %p565, %s38, 1
        %s567 = smul.addr %s566, 4
        %s568 = smul.addr %s567, 8
        %s569 = scalar_lea.vmem %s4, %s568
        %p570 = pneg %p170
        %p571 = pneg %p167
        %s572 = sand.u32 %s33, 1
        %s573 = scalar_lea.sflag [#allocation7], %s572
        %s574 = sand.u32 %s183, 1
        %s575 = scalar_lea.vmem [#allocation6], %s574
        %p576 = pneg %p196
        %p577 = pneg %p193
        %p578 = scmp.lt.s32.totalorder %s38, 1
        %s579 = scalar_select %p578, %s38, 1
        %s580 = scalar_lea.vmem %s6, %s579
        %p581 = pneg %p222
        %p582 = pneg %p219
        %p583 = scmp.lt.s32.totalorder %s38, 1
        %s584 = scalar_select %p583, %s38, 1
        %s585 = smul.addr %s584, 4
        %s586 = smul.addr %s585, 8
        %s587 = scalar_lea.vmem %s7, %s586
        %p588 = pneg %p248
        %p589 = pneg %p245
        %p590 = scmp.lt.s32.totalorder %s38, 1
        %s591 = scalar_select %p590, %s38, 1
        %s592 = smul.addr %s591, 4
        %s593 = smul.addr %s592, 8
        %s594 = scalar_lea.vmem %s8, %s593
        %p595 = pneg %p274
        %p596 = pneg %p271
        %p597 = scmp.lt.s32.totalorder %s38, 1
        %s598 = scalar_select %p597, %s38, 1
        %s599 = smul.addr %s598, 4
        %s600 = smul.addr %s599, 8
        %s601 = scalar_lea.vmem %s9, %s600
        %p602 = pneg %p300
        %p603 = pneg %p297
        %p604 = pneg %p321
        %p605 = pneg %p318
        %p606 = pneg %p342
        %p607 = pneg %p339
        %p608 = pneg %p368
        %p609 = pneg %p365
        %s610 = sand.u32 %s355, 1
        %s611 = scalar_lea.sflag [#allocation5], %s610
        %s612 = sand.u32 %s355, 1
        %s613 = smul.addr %s612, 8
        %s614 = scalar_lea.vmem [#allocation11], %s613
        %p615 = scmp.lt.s32.totalorder %s37, 1
        %s616 = scalar_select %p615, %s37, 1
        %s617 = smul.addr %s616, 8
        %s618 = scalar_lea.vmem %s0, %s617
        %p619 = scmp.lt.s32.totalorder %s38, 1
        %s620 = scalar_select %p619, %s38, 1
        %s621 = scalar_lea.vmem %s1, %s620
        %p622 = scmp.lt.s32.totalorder %s38, 1
        %s623 = scalar_select %p622, %s38, 1
        %s624 = smul.addr %s623, 4
        %s625 = smul.addr %s624, 8
        %s626 = scalar_lea.vmem %s2, %s625
        %p627 = scmp.lt.s32.totalorder %s38, 1
        %s628 = scalar_select %p627, %s38, 1
        %s629 = smul.addr %s628, 4
        %s630 = smul.addr %s629, 8
        %s631 = scalar_lea.vmem %s4, %s630
        %p632 = scmp.lt.s32.totalorder %s38, 1
        %s633 = scalar_select %p632, %s38, 1
        %s634 = scalar_lea.vmem %s6, %s633
        %p635 = scmp.lt.s32.totalorder %s38, 1
        %s636 = scalar_select %p635, %s38, 1
        %s637 = smul.addr %s636, 4
        %s638 = smul.addr %s637, 8
        %s639 = scalar_lea.vmem %s7, %s638
        %p640 = scmp.lt.s32.totalorder %s38, 1
        %s641 = scalar_select %p640, %s38, 1
        %s642 = smul.addr %s641, 4
        %s643 = smul.addr %s642, 8
        %s644 = scalar_lea.vmem %s8, %s643
        %p645 = scmp.lt.s32.totalorder %s38, 1
        %s646 = scalar_select %p645, %s38, 1
        %s647 = smul.addr %s646, 4
        %s648 = smul.addr %s647, 8
        %s649 = scalar_lea.vmem %s9, %s648
        %p650 = scmp.eq.s32.totalorder %s38, 0
        // Predicated region
        $region85: #{llama2_forward.1} parent=67 // pred_check
          %p651 = pneg %p650
        $region86: #{llama2_forward.1} parent=67 // pred_check_branch
          %653 = sbr.rel (%p651) target = $region88
        $region87: #{llama2_forward.1} parent=67 // pred_region
          %v654 = vld [vmem:[%s618] sm:$0xff]
          %vm655 = vcmask 261120
          %656 = vst.msk [vmem:[#allocation2] sm:$0xff] %vm655, %v654
        $region88: #{llama2_forward.1} parent=67 // pred_fallthru
          _
        %v657 = vld [vmem:[#allocation2] sm:$0xff]
        %v658 = vld [vmem:[%s621] sm:$0x1]
        %v659 = vmul.f32 %v657, %v657
        %vm660 = vcmask 261120
        %v661 = vsel %vm660, %v659, 0.0
        %662 = vadd.xlane.f32.xlu0 %v661
        %v663 = vpop.xlane.xlu0 %662
        %v664 = vrcp.pop 32.0
        %v665 = vmul.f32 32.0, %v664
        %v666 = vsub.f32 1.0, %v665
        %v667 = vmul.f32 %v664, %v666
        %v668 = vadd.f32 %v664, %v667
        %vm669 = vweird.f32 %v664
        %v670 = vsel %vm669, %v664, %v668
        %v671 = vmul.f32 %v663, %v670
        %v672 = vadd.f32 %v671, 1e-05
        %v673 = vrsqrt.pop %v672
        %v674 = vmul.f32 %v673, %v672
        %v675 = vmul.f32 %v674, %v673
        %v676 = vmul.f32 0.5, %v675
        %v677 = vsub.f32 1.5, %v676
        %v678 = vmul.f32 %v673, %v677
        %vm679 = vweird.f32 %v672
        %vm680 = vweird.f32 %v673
        %vm681 = vmor %vm679, %vm680
        %v682 = vsel %vm681, %v673, %v678
        %v683 = vmul.f32 %v657, %v682
        %v685 = vperm.slane %v658, 0
        %v687 = vmul.f32 %v685, %v683
        %v688 = vld [vmem:[%s626] sm:$0xff]
        %v689 = vld [vmem:[%s626 + $0x8] sm:$0xff]
        %v690 = vld [vmem:[%s626 + $0x10] sm:$0xff]
        %v691 = vld [vmem:[%s626 + $0x18] sm:$0xff]
        %v692 = vld [vmem:[%s516] sm:$0x1]
        %v694 = vperm.slane %v692, 0
        %v697 = vsel %vm660, %v687, 0
        %699 = vmatpush.msra.mxu0 0.0
        %700 = vmatpush.msra.mxu0 0.0
        %701 = vmatpush.msra.mxu0 0.0
        %702 = vmatpush.msra.mxu0 0.0
        %703 = vmatpush.msra.mxu0 0.0
        %704 = vmatpush.msra.mxu0 0.0
        %705 = vmatpush.msra.mxu0 0.0
        %706 = vmatpush.msra.mxu0 0.0
        %707 = vmatpush.msra.mxu0 0.0
        %708 = vmatpush.msra.mxu0 0.0
        %709 = vmatpush.msra.mxu0 0.0
        %710 = vmatpush.msra.mxu0 0.0
        %711 = vmatpush.msra.mxu0 %v691
        %712 = vmatpush.msra.mxu0 %v690
        %713 = vmatpush.msra.mxu0 %v689
        %714 = vmatpush.msra.mxu0 %v688
        %715 = vmatmul.f32.gmra.mxu0 %v697
        %v716 = vpop.f32.mrf.mxu0
        %v717 = vadd.f32 %v694, %v716
        %718 = vdwg.mxu0
        %v719 = vmul.f32 %v717, 0.35355338
        %721 = vrot.lane.b32.xlu0 %v719, 120
        %v722 = vpop.permute.xlu0 %721
        %723 = vrot.lane.b32.xlu0 %v719, 112
        %v724 = vpop.permute.xlu0 %723
        %725 = vrot.lane.b32.xlu0 %v719, 104
        %v726 = vpop.permute.xlu0 %725
        %728 = vrot.lane.b32.xlu0 %v717, 120
        %v729 = vpop.permute.xlu0 %728
        %730 = vrot.lane.b32.xlu0 %v717, 112
        %v731 = vpop.permute.xlu0 %730
        %732 = vrot.lane.b32.xlu0 %v717, 104
        %v733 = vpop.permute.xlu0 %732
        %734 = vrot.lane.b32.xlu0 %v717, 96
        %v735 = vpop.permute.xlu0 %734
        %736 = vrot.lane.b32.xlu0 %v729, 96
        %v737 = vpop.permute.xlu0 %736
        %738 = vrot.lane.b32.xlu0 %v731, 96
        %v739 = vpop.permute.xlu0 %738
        %740 = vrot.lane.b32.xlu0 %v733, 96
        %v741 = vpop.permute.xlu0 %740
        %746 = vxpose.xlu0.b32.start [1/16] %v735, 128
        %747 = vxpose.xlu0.b32.cont [2/16] 0.0, 128
        %748 = vxpose.xlu0.b32.cont [3/16] 0.0, 128
        %749 = vxpose.xlu0.b32.cont [4/16] 0.0, 128
        %750 = vxpose.xlu0.b32.cont [5/16] 0.0, 128
        %751 = vxpose.xlu0.b32.cont [6/16] 0.0, 128
        %752 = vxpose.xlu0.b32.cont [7/16] 0.0, 128
        %753 = vxpose.xlu0.b32.cont [8/16] 0.0, 128
        %754 = vxpose.xlu0.b32.cont [9/16] 0.0, 128
        %755 = vxpose.xlu0.b32.cont [10/16] 0.0, 128
        %756 = vxpose.xlu0.b32.cont [11/16] 0.0, 128
        %757 = vxpose.xlu0.b32.cont [12/16] 0.0, 128
        %758 = vxpose.xlu0.b32.cont [13/16] 0.0, 128
        %759 = vxpose.xlu0.b32.cont [14/16] 0.0, 128
        %760 = vxpose.xlu0.b32.cont [15/16] 0.0, 128
        %761 = vxpose.xlu0.b32.end [16/16] 0.0, 128
        %v762 = vpop.trf.xlu0
        %v763 = vpop.trf.xlu0
        %v764 = vpop.trf.xlu0
        %v765 = vpop.trf.xlu0
        %v766 = vpop.trf.xlu0
        %v767 = vpop.trf.xlu0
        %v768 = vpop.trf.xlu0
        %v769 = vpop.trf.xlu0
        %v770 = vpop.trf.xlu0
        %v771 = vpop.trf.xlu0
        %v772 = vpop.trf.xlu0
        %v773 = vpop.trf.xlu0
        %v774 = vpop.trf.xlu0
        %v775 = vpop.trf.xlu0
        %v776 = vpop.trf.xlu0
        %v777 = vpop.trf.xlu0
        %778 = vxpose.xlu0.b32.start [1/16] %v737, 128
        %779 = vxpose.xlu0.b32.cont [2/16] 0.0, 128
        %780 = vxpose.xlu0.b32.cont [3/16] 0.0, 128
        %781 = vxpose.xlu0.b32.cont [4/16] 0.0, 128
        %782 = vxpose.xlu0.b32.cont [5/16] 0.0, 128
        %783 = vxpose.xlu0.b32.cont [6/16] 0.0, 128
        %784 = vxpose.xlu0.b32.cont [7/16] 0.0, 128
        %785 = vxpose.xlu0.b32.cont [8/16] 0.0, 128
        %786 = vxpose.xlu0.b32.cont [9/16] 0.0, 128
        %787 = vxpose.xlu0.b32.cont [10/16] 0.0, 128
        %788 = vxpose.xlu0.b32.cont [11/16] 0.0, 128
        %789 = vxpose.xlu0.b32.cont [12/16] 0.0, 128
        %790 = vxpose.xlu0.b32.cont [13/16] 0.0, 128
        %791 = vxpose.xlu0.b32.cont [14/16] 0.0, 128
        %792 = vxpose.xlu0.b32.cont [15/16] 0.0, 128
        %793 = vxpose.xlu0.b32.end [16/16] 0.0, 128
        %v794 = vpop.trf.xlu0
        %v795 = vpop.trf.xlu0
        %v796 = vpop.trf.xlu0
        %v797 = vpop.trf.xlu0
        %v798 = vpop.trf.xlu0
        %v799 = vpop.trf.xlu0
        %v800 = vpop.trf.xlu0
        %v801 = vpop.trf.xlu0
        %v802 = vpop.trf.xlu0
        %v803 = vpop.trf.xlu0
        %v804 = vpop.trf.xlu0
        %v805 = vpop.trf.xlu0
        %v806 = vpop.trf.xlu0
        %v807 = vpop.trf.xlu0
        %v808 = vpop.trf.xlu0
        %v809 = vpop.trf.xlu0
        %810 = vxpose.xlu0.b32.start [1/16] %v739, 128
        %811 = vxpose.xlu0.b32.cont [2/16] 0.0, 128
        %812 = vxpose.xlu0.b32.cont [3/16] 0.0, 128
        %813 = vxpose.xlu0.b32.cont [4/16] 0.0, 128
        %814 = vxpose.xlu0.b32.cont [5/16] 0.0, 128
        %815 = vxpose.xlu0.b32.cont [6/16] 0.0, 128
        %816 = vxpose.xlu0.b32.cont [7/16] 0.0, 128
        %817 = vxpose.xlu0.b32.cont [8/16] 0.0, 128
        %818 = vxpose.xlu0.b32.cont [9/16] 0.0, 128
        %819 = vxpose.xlu0.b32.cont [10/16] 0.0, 128
        %820 = vxpose.xlu0.b32.cont [11/16] 0.0, 128
        %821 = vxpose.xlu0.b32.cont [12/16] 0.0, 128
        %822 = vxpose.xlu0.b32.cont [13/16] 0.0, 128
        %823 = vxpose.xlu0.b32.cont [14/16] 0.0, 128
        %824 = vxpose.xlu0.b32.cont [15/16] 0.0, 128
        %825 = vxpose.xlu0.b32.end [16/16] 0.0, 128
        %v826 = vpop.trf.xlu0
        %v827 = vpop.trf.xlu0
        %v828 = vpop.trf.xlu0
        %v829 = vpop.trf.xlu0
        %v830 = vpop.trf.xlu0
        %v831 = vpop.trf.xlu0
        %v832 = vpop.trf.xlu0
        %v833 = vpop.trf.xlu0
        %v834 = vpop.trf.xlu0
        %v835 = vpop.trf.xlu0
        %v836 = vpop.trf.xlu0
        %v837 = vpop.trf.xlu0
        %v838 = vpop.trf.xlu0
        %v839 = vpop.trf.xlu0
        %v840 = vpop.trf.xlu0
        %v841 = vpop.trf.xlu0
        %842 = vxpose.xlu0.b32.start [1/16] %v741, 128
        %843 = vxpose.xlu0.b32.cont [2/16] 0.0, 128
        %844 = vxpose.xlu0.b32.cont [3/16] 0.0, 128
        %845 = vxpose.xlu0.b32.cont [4/16] 0.0, 128
        %846 = vxpose.xlu0.b32.cont [5/16] 0.0, 128
        %847 = vxpose.xlu0.b32.cont [6/16] 0.0, 128
        %848 = vxpose.xlu0.b32.cont [7/16] 0.0, 128
        %849 = vxpose.xlu0.b32.cont [8/16] 0.0, 128
        %850 = vxpose.xlu0.b32.cont [9/16] 0.0, 128
        %851 = vxpose.xlu0.b32.cont [10/16] 0.0, 128
        %852 = vxpose.xlu0.b32.cont [11/16] 0.0, 128
        %853 = vxpose.xlu0.b32.cont [12/16] 0.0, 128
        %854 = vxpose.xlu0.b32.cont [13/16] 0.0, 128
        %855 = vxpose.xlu0.b32.cont [14/16] 0.0, 128
        %856 = vxpose.xlu0.b32.cont [15/16] 0.0, 128
        %857 = vxpose.xlu0.b32.end [16/16] 0.0, 128
        %v858 = vpop.trf.xlu0
        %v859 = vpop.trf.xlu0
        %v860 = vpop.trf.xlu0
        %v861 = vpop.trf.xlu0
        %v862 = vpop.trf.xlu0
        %v863 = vpop.trf.xlu0
        %v864 = vpop.trf.xlu0
        %v865 = vpop.trf.xlu0
        %v866 = vpop.trf.xlu0
        %v867 = vpop.trf.xlu0
        %v868 = vpop.trf.xlu0
        %v869 = vpop.trf.xlu0
        %v870 = vpop.trf.xlu0
        %v871 = vpop.trf.xlu0
        %v872 = vpop.trf.xlu0
        %v873 = vpop.trf.xlu0
        %vm874 = vcmask 64512
        %v875 = vsel %vm874, %v719, 0
        %877 = vmatpush.msra.mxu0 0.0
        %878 = vmatpush.msra.mxu0 0.0
        %879 = vmatpush.msra.mxu0 0.0
        %880 = vmatpush.msra.mxu0 0.0
        %881 = vmatpush.msra.mxu0 0.0
        %882 = vmatpush.msra.mxu0 0.0
        %883 = vmatpush.msra.mxu0 0.0
        %884 = vmatpush.msra.mxu0 0.0
        %885 = vmatpush.msra.mxu0 0.0
        %886 = vmatpush.msra.mxu0 0.0
        %887 = vmatpush.msra.mxu0 0.0
        %888 = vmatpush.msra.mxu0 0.0
        %889 = vmatpush.msra.mxu0 0.0
        %890 = vmatpush.msra.mxu0 0.0
        %891 = vmatpush.msra.mxu0 0.0
        %892 = vmatpush.msra.mxu0 %v762
        %893 = vmatmul.f32.gmra.mxu0 %v875
        %v894 = vpop.f32.mrf.mxu0
        %v895 = vadd.f32 0.0, %v894
        %896 = vdwg.mxu0
        %v897 = vsel %vm874, %v722, 0
        %899 = vmatpush.msra.mxu0 0.0
        %900 = vmatpush.msra.mxu0 0.0
        %901 = vmatpush.msra.mxu0 0.0
        %902 = vmatpush.msra.mxu0 0.0
        %903 = vmatpush.msra.mxu0 0.0
        %904 = vmatpush.msra.mxu0 0.0
        %905 = vmatpush.msra.mxu0 0.0
        %906 = vmatpush.msra.mxu0 0.0
        %907 = vmatpush.msra.mxu0 0.0
        %908 = vmatpush.msra.mxu0 0.0
        %909 = vmatpush.msra.mxu0 0.0
        %910 = vmatpush.msra.mxu0 0.0
        %911 = vmatpush.msra.mxu0 0.0
        %912 = vmatpush.msra.mxu0 0.0
        %913 = vmatpush.msra.mxu0 0.0
        %914 = vmatpush.msra.mxu0 %v794
        %915 = vmatmul.f32.gmra.mxu0 %v897
        %v916 = vpop.f32.mrf.mxu0
        %v917 = vadd.f32 0.0, %v916
        %918 = vdwg.mxu0
        %v919 = vsel %vm874, %v724, 0
        %921 = vmatpush.msra.mxu0 0.0
        %922 = vmatpush.msra.mxu0 0.0
        %923 = vmatpush.msra.mxu0 0.0
        %924 = vmatpush.msra.mxu0 0.0
        %925 = vmatpush.msra.mxu0 0.0
        %926 = vmatpush.msra.mxu0 0.0
        %927 = vmatpush.msra.mxu0 0.0
        %928 = vmatpush.msra.mxu0 0.0
        %929 = vmatpush.msra.mxu0 0.0
        %930 = vmatpush.msra.mxu0 0.0
        %931 = vmatpush.msra.mxu0 0.0
        %932 = vmatpush.msra.mxu0 0.0
        %933 = vmatpush.msra.mxu0 0.0
        %934 = vmatpush.msra.mxu0 0.0
        %935 = vmatpush.msra.mxu0 0.0
        %936 = vmatpush.msra.mxu0 %v826
        %937 = vmatmul.f32.gmra.mxu0 %v919
        %v938 = vpop.f32.mrf.mxu0
        %v939 = vadd.f32 0.0, %v938
        %940 = vdwg.mxu0
        %v941 = vsel %vm874, %v726, 0
        %943 = vmatpush.msra.mxu0 0.0
        %944 = vmatpush.msra.mxu0 0.0
        %945 = vmatpush.msra.mxu0 0.0
        %946 = vmatpush.msra.mxu0 0.0
        %947 = vmatpush.msra.mxu0 0.0
        %948 = vmatpush.msra.mxu0 0.0
        %949 = vmatpush.msra.mxu0 0.0
        %950 = vmatpush.msra.mxu0 0.0
        %951 = vmatpush.msra.mxu0 0.0
        %952 = vmatpush.msra.mxu0 0.0
        %953 = vmatpush.msra.mxu0 0.0
        %954 = vmatpush.msra.mxu0 0.0
        %955 = vmatpush.msra.mxu0 0.0
        %956 = vmatpush.msra.mxu0 0.0
        %957 = vmatpush.msra.mxu0 0.0
        %958 = vmatpush.msra.mxu0 %v858
        %959 = vmatmul.f32.gmra.mxu0 %v941
        %v960 = vpop.f32.mrf.mxu0
        %v961 = vadd.f32 0.0, %v960
        %962 = vdwg.mxu0
        %v963 = vsel %vm874, %v895, -inf
        %964 = vmax.xlane.f32.xlu0 %v963
        %v965 = vpop.xlane.xlu0 %964
        %v966 = vsel %vm874, %v917, -inf
        %967 = vmax.xlane.f32.xlu0 %v966
        %v968 = vpop.xlane.xlu0 %967
        %v969 = vsel %vm874, %v939, -inf
        %970 = vmax.xlane.f32.xlu0 %v969
        %v971 = vpop.xlane.xlu0 %970
        %v972 = vsel %vm874, %v961, -inf
        %973 = vmax.xlane.f32.xlu0 %v972
        %v974 = vpop.xlane.xlu0 %973
        %v975 = vsub.f32 %v895, %v965
        %v976 = vsub.f32 %v917, %v968
        %v977 = vsub.f32 %v939, %v971
        %v978 = vsub.f32 %v961, %v974
        %v979 = vmul.f32 %v975, 1.442695
        %v980 = vpow.pop %v979
        %v981 = vmul.f32 %v976, 1.442695
        %v982 = vpow.pop %v981
        %v983 = vmul.f32 %v977, 1.442695
        %v984 = vpow.pop %v983
        %v985 = vmul.f32 %v978, 1.442695
        %v986 = vpow.pop %v985
        %v987 = vsel %vm874, %v980, 0.0
        %988 = vadd.xlane.f32.xlu0 %v987
        %v989 = vpop.xlane.xlu0 %988
        %v990 = vsel %vm874, %v982, 0.0
        %991 = vadd.xlane.f32.xlu0 %v990
        %v992 = vpop.xlane.xlu0 %991
        %v993 = vsel %vm874, %v984, 0.0
        %994 = vadd.xlane.f32.xlu0 %v993
        %v995 = vpop.xlane.xlu0 %994
        %v996 = vsel %vm874, %v986, 0.0
        %997 = vadd.xlane.f32.xlu0 %v996
        %v998 = vpop.xlane.xlu0 %997
        %v999 = vrcp.pop %v989
        %v1000 = vrcp.pop %v992
        %v1001 = vrcp.pop %v995
        %v1002 = vrcp.pop %v998
        %v1003 = vmul.f32 %v980, %v999
        %v1004 = vmul.f32 %v982, %v1000
        %v1005 = vmul.f32 %v984, %v1001
        %v1006 = vmul.f32 %v986, %v1002
        %1007 = vrot.lane.b32.xlu0 %v717, 64
        %v1008 = vpop.permute.xlu0 %1007
        %1009 = vrot.lane.b32.xlu0 %v729, 64
        %v1010 = vpop.permute.xlu0 %1009
        %1011 = vrot.lane.b32.xlu0 %v731, 64
        %v1012 = vpop.permute.xlu0 %1011
        %1013 = vrot.lane.b32.xlu0 %v733, 64
        %v1014 = vpop.permute.xlu0 %1013
        %1019 = vxpose.xlu0.b32.start [1/16] %v1008, 128
        %1020 = vxpose.xlu0.b32.cont [2/16] 0.0, 128
        %1021 = vxpose.xlu0.b32.cont [3/16] 0.0, 128
        %1022 = vxpose.xlu0.b32.cont [4/16] 0.0, 128
        %1023 = vxpose.xlu0.b32.cont [5/16] 0.0, 128
        %1024 = vxpose.xlu0.b32.cont [6/16] 0.0, 128
        %1025 = vxpose.xlu0.b32.cont [7/16] 0.0, 128
        %1026 = vxpose.xlu0.b32.cont [8/16] 0.0, 128
        %1027 = vxpose.xlu0.b32.cont [9/16] 0.0, 128
        %1028 = vxpose.xlu0.b32.cont [10/16] 0.0, 128
        %1029 = vxpose.xlu0.b32.cont [11/16] 0.0, 128
        %1030 = vxpose.xlu0.b32.cont [12/16] 0.0, 128
        %1031 = vxpose.xlu0.b32.cont [13/16] 0.0, 128
        %1032 = vxpose.xlu0.b32.cont [14/16] 0.0, 128
        %1033 = vxpose.xlu0.b32.cont [15/16] 0.0, 128
        %1034 = vxpose.xlu0.b32.end [16/16] 0.0, 128
        %v1035 = vpop.trf.xlu0
        %v1036 = vpop.trf.xlu0
        %v1037 = vpop.trf.xlu0
        %v1038 = vpop.trf.xlu0
        %v1039 = vpop.trf.xlu0
        %v1040 = vpop.trf.xlu0
        %v1041 = vpop.trf.xlu0
        %v1042 = vpop.trf.xlu0
        %v1043 = vpop.trf.xlu0
        %v1044 = vpop.trf.xlu0
        %v1045 = vpop.trf.xlu0
        %v1046 = vpop.trf.xlu0
        %v1047 = vpop.trf.xlu0
        %v1048 = vpop.trf.xlu0
        %v1049 = vpop.trf.xlu0
        %v1050 = vpop.trf.xlu0
        %1051 = vxpose.xlu0.b32.start [1/16] %v1010, 128
        %1052 = vxpose.xlu0.b32.cont [2/16] 0.0, 128
        %1053 = vxpose.xlu0.b32.cont [3/16] 0.0, 128
        %1054 = vxpose.xlu0.b32.cont [4/16] 0.0, 128
        %1055 = vxpose.xlu0.b32.cont [5/16] 0.0, 128
        %1056 = vxpose.xlu0.b32.cont [6/16] 0.0, 128
        %1057 = vxpose.xlu0.b32.cont [7/16] 0.0, 128
        %1058 = vxpose.xlu0.b32.cont [8/16] 0.0, 128
        %1059 = vxpose.xlu0.b32.cont [9/16] 0.0, 128
        %1060 = vxpose.xlu0.b32.cont [10/16] 0.0, 128
        %1061 = vxpose.xlu0.b32.cont [11/16] 0.0, 128
        %1062 = vxpose.xlu0.b32.cont [12/16] 0.0, 128
        %1063 = vxpose.xlu0.b32.cont [13/16] 0.0, 128
        %1064 = vxpose.xlu0.b32.cont [14/16] 0.0, 128
        %1065 = vxpose.xlu0.b32.cont [15/16] 0.0, 128
        %1066 = vxpose.xlu0.b32.end [16/16] 0.0, 128
        %v1067 = vpop.trf.xlu0
        %v1068 = vpop.trf.xlu0
        %v1069 = vpop.trf.xlu0
        %v1070 = vpop.trf.xlu0
        %v1071 = vpop.trf.xlu0
        %v1072 = vpop.trf.xlu0
        %v1073 = vpop.trf.xlu0
        %v1074 = vpop.trf.xlu0
        %v1075 = vpop.trf.xlu0
        %v1076 = vpop.trf.xlu0
        %v1077 = vpop.trf.xlu0
        %v1078 = vpop.trf.xlu0
        %v1079 = vpop.trf.xlu0
        %v1080 = vpop.trf.xlu0
        %v1081 = vpop.trf.xlu0
        %v1082 = vpop.trf.xlu0
        %1083 = vxpose.xlu0.b32.start [1/16] %v1012, 128
        %1084 = vxpose.xlu0.b32.cont [2/16] 0.0, 128
        %1085 = vxpose.xlu0.b32.cont [3/16] 0.0, 128
        %1086 = vxpose.xlu0.b32.cont [4/16] 0.0, 128
        %1087 = vxpose.xlu0.b32.cont [5/16] 0.0, 128
        %1088 = vxpose.xlu0.b32.cont [6/16] 0.0, 128
        %1089 = vxpose.xlu0.b32.cont [7/16] 0.0, 128
        %1090 = vxpose.xlu0.b32.cont [8/16] 0.0, 128
        %1091 = vxpose.xlu0.b32.cont [9/16] 0.0, 128
        %1092 = vxpose.xlu0.b32.cont [10/16] 0.0, 128
        %1093 = vxpose.xlu0.b32.cont [11/16] 0.0, 128
        %1094 = vxpose.xlu0.b32.cont [12/16] 0.0, 128
        %1095 = vxpose.xlu0.b32.cont [13/16] 0.0, 128
        %1096 = vxpose.xlu0.b32.cont [14/16] 0.0, 128
        %1097 = vxpose.xlu0.b32.cont [15/16] 0.0, 128
        %1098 = vxpose.xlu0.b32.end [16/16] 0.0, 128
        %v1099 = vpop.trf.xlu0
        %v1100 = vpop.trf.xlu0
        %v1101 = vpop.trf.xlu0
        %v1102 = vpop.trf.xlu0
        %v1103 = vpop.trf.xlu0
        %v1104 = vpop.trf.xlu0
        %v1105 = vpop.trf.xlu0
        %v1106 = vpop.trf.xlu0
        %v1107 = vpop.trf.xlu0
        %v1108 = vpop.trf.xlu0
        %v1109 = vpop.trf.xlu0
        %v1110 = vpop.trf.xlu0
        %v1111 = vpop.trf.xlu0
        %v1112 = vpop.trf.xlu0
        %v1113 = vpop.trf.xlu0
        %v1114 = vpop.trf.xlu0
        %1115 = vxpose.xlu0.b32.start [1/16] %v1014, 128
        %1116 = vxpose.xlu0.b32.cont [2/16] 0.0, 128
        %1117 = vxpose.xlu0.b32.cont [3/16] 0.0, 128
        %1118 = vxpose.xlu0.b32.cont [4/16] 0.0, 128
        %1119 = vxpose.xlu0.b32.cont [5/16] 0.0, 128
        %1120 = vxpose.xlu0.b32.cont [6/16] 0.0, 128
        %1121 = vxpose.xlu0.b32.cont [7/16] 0.0, 128
        %1122 = vxpose.xlu0.b32.cont [8/16] 0.0, 128
        %1123 = vxpose.xlu0.b32.cont [9/16] 0.0, 128
        %1124 = vxpose.xlu0.b32.cont [10/16] 0.0, 128
        %1125 = vxpose.xlu0.b32.cont [11/16] 0.0, 128
        %1126 = vxpose.xlu0.b32.cont [12/16] 0.0, 128
        %1127 = vxpose.xlu0.b32.cont [13/16] 0.0, 128
        %1128 = vxpose.xlu0.b32.cont [14/16] 0.0, 128
        %1129 = vxpose.xlu0.b32.cont [15/16] 0.0, 128
        %1130 = vxpose.xlu0.b32.end [16/16] 0.0, 128
        %v1131 = vpop.trf.xlu0
        %v1132 = vpop.trf.xlu0
        %v1133 = vpop.trf.xlu0
        %v1134 = vpop.trf.xlu0
        %v1135 = vpop.trf.xlu0
        %v1136 = vpop.trf.xlu0
        %v1137 = vpop.trf.xlu0
        %v1138 = vpop.trf.xlu0
        %v1139 = vpop.trf.xlu0
        %v1140 = vpop.trf.xlu0
        %v1141 = vpop.trf.xlu0
        %v1142 = vpop.trf.xlu0
        %v1143 = vpop.trf.xlu0
        %v1144 = vpop.trf.xlu0
        %v1145 = vpop.trf.xlu0
        %v1146 = vpop.trf.xlu0
        %v1148 = vsel %vm874, %v1035, 0
        %v1151 = vsel %vm874, %v1003, 0
        %1153 = vmatpush.xpose.msra.mxu0 0.0
        %1154 = vmatpush.xpose.msra.mxu0 0.0
        %1155 = vmatpush.xpose.msra.mxu0 0.0
        %1156 = vmatpush.xpose.msra.mxu0 0.0
        %1157 = vmatpush.xpose.msra.mxu0 0.0
        %1158 = vmatpush.xpose.msra.mxu0 0.0
        %1159 = vmatpush.xpose.msra.mxu0 0.0
        %1160 = vmatpush.xpose.msra.mxu0 0.0
        %1161 = vmatpush.xpose.msra.mxu0 0.0
        %1162 = vmatpush.xpose.msra.mxu0 0.0
        %1163 = vmatpush.xpose.msra.mxu0 0.0
        %1164 = vmatpush.xpose.msra.mxu0 0.0
        %1165 = vmatpush.xpose.msra.mxu0 0.0
        %1166 = vmatpush.xpose.msra.mxu0 0.0
        %1167 = vmatpush.xpose.msra.mxu0 0.0
        %1168 = vmatpush.xpose.msra.mxu0 %v1151
        %1169 = vmatmul.f32.gmra.mxu0 %v1148
        %v1170 = vpop.f32.mrf.mxu0
        %v1171 = vadd.f32 0.0, %v1170
        %1172 = vdwg.mxu0
        %v1174 = vsel %vm874, %v1067, 0
        %v1177 = vsel %vm874, %v1004, 0
        %1179 = vmatpush.xpose.msra.mxu0 0.0
        %1180 = vmatpush.xpose.msra.mxu0 0.0
        %1181 = vmatpush.xpose.msra.mxu0 0.0
        %1182 = vmatpush.xpose.msra.mxu0 0.0
        %1183 = vmatpush.xpose.msra.mxu0 0.0
        %1184 = vmatpush.xpose.msra.mxu0 0.0
        %1185 = vmatpush.xpose.msra.mxu0 0.0
        %1186 = vmatpush.xpose.msra.mxu0 0.0
        %1187 = vmatpush.xpose.msra.mxu0 0.0
        %1188 = vmatpush.xpose.msra.mxu0 0.0
        %1189 = vmatpush.xpose.msra.mxu0 0.0
        %1190 = vmatpush.xpose.msra.mxu0 0.0
        %1191 = vmatpush.xpose.msra.mxu0 0.0
        %1192 = vmatpush.xpose.msra.mxu0 0.0
        %1193 = vmatpush.xpose.msra.mxu0 0.0
        %1194 = vmatpush.xpose.msra.mxu0 %v1177
        %1195 = vmatmul.f32.gmra.mxu0 %v1174
        %v1196 = vpop.f32.mrf.mxu0
        %v1197 = vadd.f32 0.0, %v1196
        %1198 = vdwg.mxu0
        %v1200 = vsel %vm874, %v1099, 0
        %v1203 = vsel %vm874, %v1005, 0
        %1205 = vmatpush.xpose.msra.mxu0 0.0
        %1206 = vmatpush.xpose.msra.mxu0 0.0
        %1207 = vmatpush.xpose.msra.mxu0 0.0
        %1208 = vmatpush.xpose.msra.mxu0 0.0
        %1209 = vmatpush.xpose.msra.mxu0 0.0
        %1210 = vmatpush.xpose.msra.mxu0 0.0
        %1211 = vmatpush.xpose.msra.mxu0 0.0
        %1212 = vmatpush.xpose.msra.mxu0 0.0
        %1213 = vmatpush.xpose.msra.mxu0 0.0
        %1214 = vmatpush.xpose.msra.mxu0 0.0
        %1215 = vmatpush.xpose.msra.mxu0 0.0
        %1216 = vmatpush.xpose.msra.mxu0 0.0
        %1217 = vmatpush.xpose.msra.mxu0 0.0
        %1218 = vmatpush.xpose.msra.mxu0 0.0
        %1219 = vmatpush.xpose.msra.mxu0 0.0
        %1220 = vmatpush.xpose.msra.mxu0 %v1203
        %1221 = vmatmul.f32.gmra.mxu0 %v1200
        %v1222 = vpop.f32.mrf.mxu0
        %v1223 = vadd.f32 0.0, %v1222
        %1224 = vdwg.mxu0
        %v1226 = vsel %vm874, %v1131, 0
        %v1229 = vsel %vm874, %v1006, 0
        %1231 = vmatpush.xpose.msra.mxu0 0.0
        %1232 = vmatpush.xpose.msra.mxu0 0.0
        %1233 = vmatpush.xpose.msra.mxu0 0.0
        %1234 = vmatpush.xpose.msra.mxu0 0.0
        %1235 = vmatpush.xpose.msra.mxu0 0.0
        %1236 = vmatpush.xpose.msra.mxu0 0.0
        %1237 = vmatpush.xpose.msra.mxu0 0.0
        %1238 = vmatpush.xpose.msra.mxu0 0.0
        %1239 = vmatpush.xpose.msra.mxu0 0.0
        %1240 = vmatpush.xpose.msra.mxu0 0.0
        %1241 = vmatpush.xpose.msra.mxu0 0.0
        %1242 = vmatpush.xpose.msra.mxu0 0.0
        %1243 = vmatpush.xpose.msra.mxu0 0.0
        %1244 = vmatpush.xpose.msra.mxu0 0.0
        %1245 = vmatpush.xpose.msra.mxu0 0.0
        %1246 = vmatpush.xpose.msra.mxu0 %v1229
        %1247 = vmatmul.f32.gmra.mxu0 %v1226
        %v1248 = vpop.f32.mrf.mxu0
        %v1249 = vadd.f32 0.0, %v1248
        %1250 = vdwg.mxu0
        %1251 = vxpose.xlu0.b32.start [1/16] %v1171, 128
        %1252 = vxpose.xlu0.b32.cont [2/16] 0.0, 128
        %1253 = vxpose.xlu0.b32.cont [3/16] 0.0, 128
        %1254 = vxpose.xlu0.b32.cont [4/16] 0.0, 128
        %1255 = vxpose.xlu0.b32.cont [5/16] 0.0, 128
        %1256 = vxpose.xlu0.b32.cont [6/16] 0.0, 128
        %1257 = vxpose.xlu0.b32.cont [7/16] 0.0, 128
        %1258 = vxpose.xlu0.b32.cont [8/16] 0.0, 128
        %1259 = vxpose.xlu0.b32.cont [9/16] 0.0, 128
        %1260 = vxpose.xlu0.b32.cont [10/16] 0.0, 128
        %1261 = vxpose.xlu0.b32.cont [11/16] 0.0, 128
        %1262 = vxpose.xlu0.b32.cont [12/16] 0.0, 128
        %1263 = vxpose.xlu0.b32.cont [13/16] 0.0, 128
        %1264 = vxpose.xlu0.b32.cont [14/16] 0.0, 128
        %1265 = vxpose.xlu0.b32.cont [15/16] 0.0, 128
        %1266 = vxpose.xlu0.b32.end [16/16] 0.0, 128
        %v1267 = vpop.trf.xlu0
        %v1268 = vpop.trf.xlu0
        %v1269 = vpop.trf.xlu0
        %v1270 = vpop.trf.xlu0
        %v1271 = vpop.trf.xlu0
        %v1272 = vpop.trf.xlu0
        %v1273 = vpop.trf.xlu0
        %v1274 = vpop.trf.xlu0
        %v1275 = vpop.trf.xlu0
        %v1276 = vpop.trf.xlu0
        %v1277 = vpop.trf.xlu0
        %v1278 = vpop.trf.xlu0
        %v1279 = vpop.trf.xlu0
        %v1280 = vpop.trf.xlu0
        %v1281 = vpop.trf.xlu0
        %v1282 = vpop.trf.xlu0
        %1283 = vxpose.xlu0.b32.start [1/16] %v1197, 128
        %1284 = vxpose.xlu0.b32.cont [2/16] 0.0, 128
        %1285 = vxpose.xlu0.b32.cont [3/16] 0.0, 128
        %1286 = vxpose.xlu0.b32.cont [4/16] 0.0, 128
        %1287 = vxpose.xlu0.b32.cont [5/16] 0.0, 128
        %1288 = vxpose.xlu0.b32.cont [6/16] 0.0, 128
        %1289 = vxpose.xlu0.b32.cont [7/16] 0.0, 128
        %1290 = vxpose.xlu0.b32.cont [8/16] 0.0, 128
        %1291 = vxpose.xlu0.b32.cont [9/16] 0.0, 128
        %1292 = vxpose.xlu0.b32.cont [10/16] 0.0, 128
        %1293 = vxpose.xlu0.b32.cont [11/16] 0.0, 128
        %1294 = vxpose.xlu0.b32.cont [12/16] 0.0, 128
        %1295 = vxpose.xlu0.b32.cont [13/16] 0.0, 128
        %1296 = vxpose.xlu0.b32.cont [14/16] 0.0, 128
        %1297 = vxpose.xlu0.b32.cont [15/16] 0.0, 128
        %1298 = vxpose.xlu0.b32.end [16/16] 0.0, 128
        %v1299 = vpop.trf.xlu0
        %v1300 = vpop.trf.xlu0
        %v1301 = vpop.trf.xlu0
        %v1302 = vpop.trf.xlu0
        %v1303 = vpop.trf.xlu0
        %v1304 = vpop.trf.xlu0
        %v1305 = vpop.trf.xlu0
        %v1306 = vpop.trf.xlu0
        %v1307 = vpop.trf.xlu0
        %v1308 = vpop.trf.xlu0
        %v1309 = vpop.trf.xlu0
        %v1310 = vpop.trf.xlu0
        %v1311 = vpop.trf.xlu0
        %v1312 = vpop.trf.xlu0
        %v1313 = vpop.trf.xlu0
        %v1314 = vpop.trf.xlu0
        %1315 = vxpose.xlu0.b32.start [1/16] %v1223, 128
        %1316 = vxpose.xlu0.b32.cont [2/16] 0.0, 128
        %1317 = vxpose.xlu0.b32.cont [3/16] 0.0, 128
        %1318 = vxpose.xlu0.b32.cont [4/16] 0.0, 128
        %1319 = vxpose.xlu0.b32.cont [5/16] 0.0, 128
        %1320 = vxpose.xlu0.b32.cont [6/16] 0.0, 128
        %1321 = vxpose.xlu0.b32.cont [7/16] 0.0, 128
        %1322 = vxpose.xlu0.b32.cont [8/16] 0.0, 128
        %1323 = vxpose.xlu0.b32.cont [9/16] 0.0, 128
        %1324 = vxpose.xlu0.b32.cont [10/16] 0.0, 128
        %1325 = vxpose.xlu0.b32.cont [11/16] 0.0, 128
        %1326 = vxpose.xlu0.b32.cont [12/16] 0.0, 128
        %1327 = vxpose.xlu0.b32.cont [13/16] 0.0, 128
        %1328 = vxpose.xlu0.b32.cont [14/16] 0.0, 128
        %1329 = vxpose.xlu0.b32.cont [15/16] 0.0, 128
        %1330 = vxpose.xlu0.b32.end [16/16] 0.0, 128
        %v1331 = vpop.trf.xlu0
        %v1332 = vpop.trf.xlu0
        %v1333 = vpop.trf.xlu0
        %v1334 = vpop.trf.xlu0
        %v1335 = vpop.trf.xlu0
        %v1336 = vpop.trf.xlu0
        %v1337 = vpop.trf.xlu0
        %v1338 = vpop.trf.xlu0
        %v1339 = vpop.trf.xlu0
        %v1340 = vpop.trf.xlu0
        %v1341 = vpop.trf.xlu0
        %v1342 = vpop.trf.xlu0
        %v1343 = vpop.trf.xlu0
        %v1344 = vpop.trf.xlu0
        %v1345 = vpop.trf.xlu0
        %v1346 = vpop.trf.xlu0
        %1347 = vxpose.xlu0.b32.start [1/16] %v1249, 128
        %1348 = vxpose.xlu0.b32.cont [2/16] 0.0, 128
        %1349 = vxpose.xlu0.b32.cont [3/16] 0.0, 128
        %1350 = vxpose.xlu0.b32.cont [4/16] 0.0, 128
        %1351 = vxpose.xlu0.b32.cont [5/16] 0.0, 128
        %1352 = vxpose.xlu0.b32.cont [6/16] 0.0, 128
        %1353 = vxpose.xlu0.b32.cont [7/16] 0.0, 128
        %1354 = vxpose.xlu0.b32.cont [8/16] 0.0, 128
        %1355 = vxpose.xlu0.b32.cont [9/16] 0.0, 128
        %1356 = vxpose.xlu0.b32.cont [10/16] 0.0, 128
        %1357 = vxpose.xlu0.b32.cont [11/16] 0.0, 128
        %1358 = vxpose.xlu0.b32.cont [12/16] 0.0, 128
        %1359 = vxpose.xlu0.b32.cont [13/16] 0.0, 128
        %1360 = vxpose.xlu0.b32.cont [14/16] 0.0, 128
        %1361 = vxpose.xlu0.b32.cont [15/16] 0.0, 128
        %1362 = vxpose.xlu0.b32.end [16/16] 0.0, 128
        %v1363 = vpop.trf.xlu0
        %v1364 = vpop.trf.xlu0
        %v1365 = vpop.trf.xlu0
        %v1366 = vpop.trf.xlu0
        %v1367 = vpop.trf.xlu0
        %v1368 = vpop.trf.xlu0
        %v1369 = vpop.trf.xlu0
        %v1370 = vpop.trf.xlu0
        %v1371 = vpop.trf.xlu0
        %v1372 = vpop.trf.xlu0
        %v1373 = vpop.trf.xlu0
        %v1374 = vpop.trf.xlu0
        %v1375 = vpop.trf.xlu0
        %v1376 = vpop.trf.xlu0
        %v1377 = vpop.trf.xlu0
        %v1378 = vpop.trf.xlu0
        %v1379 = vrot.slane %v1331, 4
        %vm1380 = vcmask 1047556
        %v1381 = vsel %vm1380, %v1379, %v1267
        %v1382 = vrot.slane %v1267, 4
        %v1383 = vsel %vm1380, %v1331, %v1382
        %v1385 = vunpack.c.l.s4 1983009808
        %v1386 = vunpack.c.0.s8 %v1385
        %v1387 = vperm.slane %v1381, %v1386
        %v1389 = vunpack.c.l.s4 1983009808
        %v1390 = vunpack.c.0.s8 %v1389
        %v1391 = vperm.slane %v1383, %v1390
        %v1392 = vrot.slane %v1363, 4
        %v1393 = vsel %vm1380, %v1392, %v1299
        %v1394 = vrot.slane %v1299, 4
        %v1395 = vsel %vm1380, %v1363, %v1394
        %v1397 = vunpack.c.l.s4 1983009808
        %v1398 = vunpack.c.0.s8 %v1397
        %v1399 = vperm.slane %v1393, %v1398
        %v1401 = vunpack.c.l.s4 1983009808
        %v1402 = vunpack.c.0.s8 %v1401
        %v1403 = vperm.slane %v1395, %v1402
        %v1404 = vrot.slane %v1399, 4
        %v1405 = vsel %vm1380, %v1404, %v1387
        %v1406 = vrot.slane %v1387, 4
        %v1407 = vsel %vm1380, %v1399, %v1406
        %v1409 = vunpack.c.l.s4 1934713408
        %v1410 = vunpack.c.0.s8 %v1409
        %v1411 = vperm.slane %v1405, %v1410
        %v1413 = vunpack.c.l.s4 1934713408
        %v1414 = vunpack.c.0.s8 %v1413
        %v1415 = vperm.slane %v1407, %v1414
        %v1416 = vrot.slane %v1403, 4
        %v1417 = vsel %vm1380, %v1416, %v1391
        %v1418 = vrot.slane %v1391, 4
        %v1419 = vsel %vm1380, %v1403, %v1418
        %v1421 = vunpack.c.l.s4 1934713408
        %v1422 = vunpack.c.0.s8 %v1421
        %v1423 = vperm.slane %v1417, %v1422
        %v1425 = vunpack.c.l.s4 1934713408
        %v1426 = vunpack.c.0.s8 %v1425
        %v1427 = vperm.slane %v1419, %v1426
        %v1428 = vrot.slane %v1411, 4
        %v1429 = vsel %vm1380, 0.0, %v1428
        %v1430 = vrot.slane %v1415, 4
        %v1431 = vsel %vm1380, 0.0, %v1430
        %v1432 = vrot.slane %v1423, 4
        %v1433 = vsel %vm1380, 0.0, %v1432
        %v1434 = vrot.slane %v1427, 4
        %v1435 = vsel %vm1380, 0.0, %v1434
        %v1436 = vsel %vm1380, %v1430, %v1411
        %v1438 = vunpack.c.l.s4 1983009808
        %v1439 = vunpack.c.0.s8 %v1438
        %v1440 = vperm.slane %v1436, %v1439
        %v1441 = vrot.slane %v1431, 4
        %v1442 = vsel %vm1380, %v1441, %v1429
        %v1444 = vunpack.c.l.s4 1983009808
        %v1445 = vunpack.c.0.s8 %v1444
        %v1446 = vperm.slane %v1442, %v1445
        %v1447 = vsel %vm1380, %v1434, %v1423
        %v1449 = vunpack.c.l.s4 1983009808
        %v1450 = vunpack.c.0.s8 %v1449
        %v1451 = vperm.slane %v1447, %v1450
        %v1452 = vrot.slane %v1435, 4
        %v1453 = vsel %vm1380, %v1452, %v1433
        %v1455 = vunpack.c.l.s4 1983009808
        %v1456 = vunpack.c.0.s8 %v1455
        %v1457 = vperm.slane %v1453, %v1456
        %v1458 = vrot.slane %v1446, 4
        %v1459 = vsel %vm1380, %v1458, %v1440
        %v1460 = vrot.slane %v1440, 4
        %v1461 = vsel %vm1380, %v1446, %v1460
        %v1463 = vunpack.c.l.s4 1934713408
        %v1464 = vunpack.c.0.s8 %v1463
        %v1465 = vperm.slane %v1459, %v1464
        %v1467 = vunpack.c.l.s4 1934713408
        %v1468 = vunpack.c.0.s8 %v1467
        %v1469 = vperm.slane %v1461, %v1468
        %v1470 = vrot.slane %v1457, 4
        %v1471 = vsel %vm1380, %v1470, %v1451
        %v1472 = vrot.slane %v1451, 4
        %v1473 = vsel %vm1380, %v1457, %v1472
        %v1475 = vunpack.c.l.s4 1934713408
        %v1476 = vunpack.c.0.s8 %v1475
        %v1477 = vperm.slane %v1471, %v1476
        %v1479 = vunpack.c.l.s4 1934713408
        %v1480 = vunpack.c.0.s8 %v1479
        %v1481 = vperm.slane %v1473, %v1480
        %v1482 = vrot.slane %v1477, 4
        %v1483 = vsel %vm1380, %v1482, %v1465
        %v1484 = vrot.slane %v1465, 4
        %v1485 = vsel %vm1380, %v1477, %v1484
        %v1486 = vrot.slane %v1481, 4
        %v1487 = vsel %vm1380, %v1486, %v1469
        %v1488 = vrot.slane %v1469, 4
        %v1489 = vsel %vm1380, %v1481, %v1488
        %1491 = vrot.lane.b32.xlu0 %v1485, 8
        %v1492 = vpop.permute.xlu0 %1491
        %1495 = vrot.lane.b32.xlu0 %v1487, 16
        %v1496 = vpop.permute.xlu0 %1495
        %1499 = vrot.lane.b32.xlu0 %v1489, 24
        %v1500 = vpop.permute.xlu0 %1499
        %v1502 = vsel %vm874, %v1483, %v1492
        %vm1503 = vcmask 130048
        %v1504 = vsel %vm1503, %v1502, %v1496
        %vm1505 = vcmask 195584
        %v1506 = vsel %vm1505, %v1504, %v1500
        %v1507 = vld [vmem:[%s631] sm:$0xff]
        %v1508 = vld [vmem:[%s631 + $0x8] sm:$0xff]
        %v1509 = vld [vmem:[%s631 + $0x10] sm:$0xff]
        %v1510 = vld [vmem:[%s631 + $0x18] sm:$0xff]
        %v1511 = vld [vmem:[%s525] sm:$0x1]
        %v1513 = vperm.slane %v1511, 0
        %v1516 = vsel %vm660, %v1506, 0
        %1518 = vmatpush.msra.mxu0 0.0
        %1519 = vmatpush.msra.mxu0 0.0
        %1520 = vmatpush.msra.mxu0 0.0
        %1521 = vmatpush.msra.mxu0 0.0
        %1522 = vmatpush.msra.mxu0 0.0
        %1523 = vmatpush.msra.mxu0 0.0
        %1524 = vmatpush.msra.mxu0 0.0
        %1525 = vmatpush.msra.mxu0 0.0
        %1526 = vmatpush.msra.mxu0 0.0
        %1527 = vmatpush.msra.mxu0 0.0
        %1528 = vmatpush.msra.mxu0 0.0
        %1529 = vmatpush.msra.mxu0 0.0
        %1530 = vmatpush.msra.mxu0 %v1510
        %1531 = vmatpush.msra.mxu0 %v1509
        %1532 = vmatpush.msra.mxu0 %v1508
        %1533 = vmatpush.msra.mxu0 %v1507
        %1534 = vmatmul.f32.gmra.mxu0 %v1516
        %v1535 = vpop.f32.mrf.mxu0
        %v1536 = vadd.f32 %v1513, %v1535
        %1537 = vdwg.mxu0
        %v1538 = vadd.f32 %v657, %v1536
        %v1539 = vld [vmem:[%s634] sm:$0x1]
        %v1540 = vmul.f32 %v1538, %v1538
        %v1541 = vsel %vm660, %v1540, 0.0
        %1542 = vadd.xlane.f32.xlu0 %v1541
        %v1543 = vpop.xlane.xlu0 %1542
        %v1544 = vmul.f32 %v1543, %v670
        %v1545 = vadd.f32 %v1544, 1e-05
        %v1546 = vrsqrt.pop %v1545
        %v1547 = vmul.f32 %v1546, %v1545
        %v1548 = vmul.f32 %v1547, %v1546
        %v1549 = vmul.f32 0.5, %v1548
        %v1550 = vsub.f32 1.5, %v1549
        %v1551 = vmul.f32 %v1546, %v1550
        %vm1552 = vweird.f32 %v1545
        %vm1553 = vweird.f32 %v1546
        %vm1554 = vmor %vm1552, %vm1553
        %v1555 = vsel %vm1554, %v1546, %v1551
        %v1556 = vmul.f32 %v1538, %v1555
        %v1558 = vperm.slane %v1539, 0
        %v1560 = vmul.f32 %v1558, %v1556
        %v1561 = vld [vmem:[%s639] sm:$0xff]
        %v1562 = vld [vmem:[%s639 + $0x8] sm:$0xff]
        %v1563 = vld [vmem:[%s639 + $0x10] sm:$0xff]
        %v1564 = vld [vmem:[%s639 + $0x18] sm:$0xff]
        %v1566 = vsel %vm660, %v1560, 0
        %1568 = vmatpush.msra.mxu0 0.0
        %1569 = vmatpush.msra.mxu0 0.0
        %1570 = vmatpush.msra.mxu0 0.0
        %1571 = vmatpush.msra.mxu0 0.0
        %1572 = vmatpush.msra.mxu0 0.0
        %1573 = vmatpush.msra.mxu0 0.0
        %1574 = vmatpush.msra.mxu0 0.0
        %1575 = vmatpush.msra.mxu0 0.0
        %1576 = vmatpush.msra.mxu0 0.0
        %1577 = vmatpush.msra.mxu0 0.0
        %1578 = vmatpush.msra.mxu0 0.0
        %1579 = vmatpush.msra.mxu0 0.0
        %1580 = vmatpush.msra.mxu0 %v1564
        %1581 = vmatpush.msra.mxu0 %v1563
        %1582 = vmatpush.msra.mxu0 %v1562
        %1583 = vmatpush.msra.mxu0 %v1561
        %1584 = vmatmul.f32.gmra.mxu0 %v1566
        %v1585 = vpop.f32.mrf.mxu0
        %v1586 = vadd.f32 0.0, %v1585
        %1587 = vdwg.mxu0
        %v1588 = vld [vmem:[%s644] sm:$0xff]
        %v1589 = vld [vmem:[%s644 + $0x8] sm:$0xff]
        %v1590 = vld [vmem:[%s644 + $0x10] sm:$0xff]
        %v1591 = vld [vmem:[%s644 + $0x18] sm:$0xff]
        %v1593 = vsel %vm660, %v1586, 0
        %1595 = vmatpush.msra.mxu0 0.0
        %1596 = vmatpush.msra.mxu0 0.0
        %1597 = vmatpush.msra.mxu0 0.0
        %1598 = vmatpush.msra.mxu0 0.0
        %1599 = vmatpush.msra.mxu0 0.0
        %1600 = vmatpush.msra.mxu0 0.0
        %1601 = vmatpush.msra.mxu0 0.0
        %1602 = vmatpush.msra.mxu0 0.0
        %1603 = vmatpush.msra.mxu0 0.0
        %1604 = vmatpush.msra.mxu0 0.0
        %1605 = vmatpush.msra.mxu0 0.0
        %1606 = vmatpush.msra.mxu0 0.0
        %1607 = vmatpush.msra.mxu0 %v1591
        %1608 = vmatpush.msra.mxu0 %v1590
        %1609 = vmatpush.msra.mxu0 %v1589
        %1610 = vmatpush.msra.mxu0 %v1588
        %1611 = vmatmul.f32.gmra.mxu0 %v1593
        %v1612 = vpop.f32.mrf.mxu0
        %v1613 = vadd.f32 0.0, %v1612
        %1614 = vdwg.mxu0
        %v1615 = vxor.u32 %v1586, 2147483648
        %v1616 = vmul.f32 %v1615, 1.442695
        %v1617 = vpow.pop %v1616
        %v1618 = vadd.f32 %v1617, 1.0
        %v1619 = vrcp.pop %v1618
        %v1620 = vmul.f32 %v1618, %v1619
        %v1621 = vsub.f32 1.0, %v1620
        %v1622 = vmul.f32 %v1619, %v1621
        %v1623 = vadd.f32 %v1619, %v1622
        %vm1624 = vweird.f32 %v1618
        %vm1625 = vweird.f32 %v1619
        %vm1626 = vmor %vm1624, %vm1625
        %v1627 = vsel %vm1626, %v1619, %v1623
        %v1628 = vand.u32 2147483647, %v1618
        %vm1629 = vcmp.eq.f32.partialorder %v1628, 8.507059e+37
        %v1630 = vand.u32 %v1618, 2147483648
        %v1631 = vor.u32 1.1754944e-38, %v1630
        %v1632 = vsel %vm1629, %v1631, %v1627
        %v1633 = vmul.f32 1.0, %v1632
        %v1634 = vmul.f32 %v1586, %v1633
        %v1635 = vmul.f32 %v1634, %v1613
        %v1636 = vld [vmem:[%s649] sm:$0xff]
        %v1637 = vld [vmem:[%s649 + $0x8] sm:$0xff]
        %v1638 = vld [vmem:[%s649 + $0x10] sm:$0xff]
        %v1639 = vld [vmem:[%s649 + $0x18] sm:$0xff]
        %v1641 = vsel %vm660, %v1635, 0
        %1643 = vmatpush.msra.mxu0 0.0
        %1644 = vmatpush.msra.mxu0 0.0
        %1645 = vmatpush.msra.mxu0 0.0
        %1646 = vmatpush.msra.mxu0 0.0
        %1647 = vmatpush.msra.mxu0 0.0
        %1648 = vmatpush.msra.mxu0 0.0
        %1649 = vmatpush.msra.mxu0 0.0
        %1650 = vmatpush.msra.mxu0 0.0
        %1651 = vmatpush.msra.mxu0 0.0
        %1652 = vmatpush.msra.mxu0 0.0
        %1653 = vmatpush.msra.mxu0 0.0
        %1654 = vmatpush.msra.mxu0 0.0
        %1655 = vmatpush.msra.mxu0 %v1639
        %1656 = vmatpush.msra.mxu0 %v1638
        %1657 = vmatpush.msra.mxu0 %v1637
        %1658 = vmatpush.msra.mxu0 %v1636
        %1659 = vmatmul.f32.gmra.mxu0 %v1641
        %v1660 = vpop.f32.mrf.mxu0
        %v1661 = vadd.f32 %v657, %v1660
        %1662 = vdwg.mxu0
        %1663 = vst.msk [vmem:[#allocation2] sm:$0xff] %vm660, %v1661
        %p1664 = scmp.eq.s32.totalorder %s38, 1
        // Predicated region
        $region89: #{llama2_forward.1} parent=67 // pred_check
          %p1665 = pneg %p1664
        $region90: #{llama2_forward.1} parent=67 // pred_check_branch
          %1667 = sbr.rel (%p1665) target = $region92
        $region91: #{llama2_forward.1} parent=67 // pred_region
          %v1668 = vld [vmem:[#allocation8] sm:$0x1]
          %v1669 = vmul.f32 %v1661, %v1661
          %v1670 = vsel %vm660, %v1669, 0.0
          %1671 = vadd.xlane.f32.xlu0 %v1670
          %v1672 = vpop.xlane.xlu0 %1671
          %v1673 = vmul.f32 %v1672, %v670
          %v1674 = vadd.f32 %v1673, 1e-05
          %v1675 = vrsqrt.pop %v1674
          %v1676 = vmul.f32 %v1675, %v1674
          %v1677 = vmul.f32 %v1676, %v1675
          %v1678 = vmul.f32 0.5, %v1677
          %v1679 = vsub.f32 1.5, %v1678
          %v1680 = vmul.f32 %v1675, %v1679
          %vm1681 = vweird.f32 %v1674
          %vm1682 = vweird.f32 %v1675
          %vm1683 = vmor %vm1681, %vm1682
          %v1684 = vsel %vm1683, %v1675, %v1680
          %v1685 = vmul.f32 %v1661, %v1684
          %v1687 = vperm.slane %v1668, 0
          %v1689 = vmul.f32 %v1687, %v1685
          %v1690 = vld [vmem:[#allocation9] sm:$0xff]
          %v1691 = vld [vmem:[#allocation9 + $0x8] sm:$0xff]
          %v1692 = vld [vmem:[#allocation9 + $0x10] sm:$0xff]
          %v1693 = vld [vmem:[#allocation9 + $0x18] sm:$0xff]
          %v1695 = vsel %vm660, %v1689, 0
          %1697 = vmatpush.msra.mxu0 0.0
          %1698 = vmatpush.msra.mxu0 0.0
          %1699 = vmatpush.msra.mxu0 0.0
          %1700 = vmatpush.msra.mxu0 0.0
          %1701 = vmatpush.msra.mxu0 0.0
          %1702 = vmatpush.msra.mxu0 0.0
          %1703 = vmatpush.msra.mxu0 0.0
          %1704 = vmatpush.msra.mxu0 0.0
          %1705 = vmatpush.msra.mxu0 0.0
          %1706 = vmatpush.msra.mxu0 0.0
          %1707 = vmatpush.msra.mxu0 0.0
          %1708 = vmatpush.msra.mxu0 0.0
          %1709 = vmatpush.msra.mxu0 %v1693
          %1710 = vmatpush.msra.mxu0 %v1692
          %1711 = vmatpush.msra.mxu0 %v1691
          %1712 = vmatpush.msra.mxu0 %v1690
          %1713 = vmatmul.f32.gmra.mxu0 %v1695
          %v1714 = vpop.f32.mrf.mxu0
          %v1715 = vadd.f32 0.0, %v1714
          %1716 = vdwg.mxu0
          %1717 = vst [vmem:[%s614] sm:$0xff] %v1715
        $region92: #{llama2_forward.1} parent=67 // pred_fallthru
          _
        %s1718 = sand.u32 %s355, 1
        %s1719 = scalar_lea.sflag [#allocation5], %s1718
        %s1720 = sand.u32 %s355, 1
        %s1721 = smul.addr %s1720, 8
        %s1722 = scalar_lea.vmem [#allocation11], %s1721
        // Predicated region
        $region93: #{llama2_forward.1} parent=67 // pred_check
          %p1723 = pneg %p365
        $region94: #{llama2_forward.1} parent=67 // pred_check_branch
          %1725 = sbr.rel (%p1723) target = $region96
        $region95: #{llama2_forward.1} parent=67 // pred_region
          %1727 = vsyncadd %s1719, 0
          %s1728 = smul.addr %s37, 8
          %s1729 = scalar_lea.hbm %s12, %s1728
          %s1731 = sshll.u32 %s1722, 4
          %s1732 = int_to_ptr.vmem [resolvable:$true] %s1731
          %s1733 = sshll.u32 %s1729, 4
          %s1734 = int_to_ptr.hbm [resolvable:$true] %s1733
          %1736 = dma.vmem_to_hbm [thread:$0]  %s1732, 128, %s1734, %s1719
        $region96: #{llama2_forward.1} parent=67 // pred_fallthru
          _
      $region68: #{llama2_forward.1} parent=5 // pred_fallthru
        _
      %p1737 = scmp.le.s32.totalorder 2, %s28
      // Predicated region
      $region97: #{llama2_forward.1} parent=5 // pred_check
        %p1738 = pneg %p1737
      $region98: #{llama2_forward.1} parent=5 // pred_check_branch
        %1740 = sbr.rel (%p1738) target = $region100
      $region99: #{llama2_forward.1} parent=5 // pred_region
        %s1741 = ssub.s32 %s28, 2
        // Predicated region
        $region101: #{llama2_forward.1} parent=99 // pred_check
          %p1742 = pneg %p371
        $region102: #{llama2_forward.1} parent=99 // pred_check_branch
          %1744 = sbr.rel (%p1742) target = $region104
        $region103: #{llama2_forward.1} parent=99 // pred_region
          %s1745 = sand.u32 %s356, 1
          %s1746 = scalar_lea.sflag [#allocation5], %s1745
          %s1747 = sand.u32 %s356, 1
          %s1748 = smul.addr %s1747, 8
          %s1749 = scalar_lea.vmem [#allocation11], %s1748
          %1751 = dma.done %s1746, 128
        $region104: #{llama2_forward.1} parent=99 // pred_fallthru
          _
      $region100: #{llama2_forward.1} parent=5 // pred_fallthru
        _
    $region6: #{llama2_forward.1} parent=1 // loop_footer
      %s32 = sadd.s32 1, %s28
    $region7: #{llama2_forward.1} parent=1 // loop_footer_branch
      %27 = sbr.rel target = $region3
    $region8: #{llama2_forward.1} parent=1 // loop_exit
      _
    %1752 = vsyncpa [#allocation4], 1
    %s1753 = scalar_lea.sflag [#allocation4], 1
    %1754 = vsyncpa %s1753, 1
    %1755 = vsyncpa [#allocation7], 1
    %s1756 = scalar_lea.sflag [#allocation7], 1
    %1757 = vsyncpa %s1756, 1
    %1758 = vsyncpa [#allocation10], 1
    %1759 = vsyncpa [#allocation5], 1
    %s1760 = scalar_lea.sflag [#allocation5], 1
    %1761 = vsyncpa %s1760, 1

</llo_original>
